<compile_context>
chip_gen: v5e
topology: v5e:2x2
jax: 0.10.0
libtpu: 0.0.40
codegen_flags: <defaults>
</compile_context>

<pallas_src>
import jax
import jax.numpy as jnp
import numpy as np
from jax.experimental import pallas as pl
from jax.experimental.pallas import tpu as pltpu


def _round_up(n, m):
    return ((n + m - 1) // m) * m


def sdn_kernel(x_ref, w1_ref, b1_ref, w2_ref, b2_ref, w3_ref, b3_ref, o_ref):
    # ---- layer 1: Linear(F,512) [BN scale pre-folded] + bias + ReLU --------
    h1 = jnp.dot(x_ref[...], w1_ref[...], preferred_element_type=jnp.float32)
    h1 = jnp.maximum(h1 + b1_ref[...], 0.0)

    # ---- layer 2: Linear(512,512) [BN scale pre-folded] + bias + ReLU ------
    h2 = jnp.dot(h1.astype(jnp.bfloat16), w2_ref[...],
                 preferred_element_type=jnp.float32)
    h2 = jnp.maximum(h2 + b2_ref[...], 0.0)

    # ---- layer 3: Linear(512,num_tags) + bias + Sigmoid --------------------
    logits = jnp.dot(h2.astype(jnp.bfloat16), w3_ref[...],
                     preferred_element_type=jnp.float32) + b3_ref[...]
    # sigmoid(x) = 1 / (1 + exp(-x)); exp -> EUP, approx reciprocal -> EUP.
    o_ref[...] = pl.reciprocal(1.0 + jnp.exp(-logits), approx=True)


def sdn_forward(x, params, *, batch_tile=256):
    """x: (B, F) float32.  params: dict of folded weights.  Returns (B, T) f32."""
    B, F = x.shape
    H = params["w1"].shape[1]
    T = params["w3"].shape[1]
    assert H % 128 == 0

    w1, b1 = params["w1"], params["b1"]
    w2, b2 = params["w2"], params["b2"]
    w3, b3 = params["w3"], params["b3"]

    # --- pad feature / tag dims up to lane multiples (128) ------------------
    F_pad = _round_up(F, 128)
    T_pad = _round_up(T, 128)
    if F_pad != F:
        x = jnp.pad(x, ((0, 0), (0, F_pad - F)))
        w1 = jnp.pad(w1, ((0, F_pad - F), (0, 0)))
    if T_pad != T:
        w3 = jnp.pad(w3, ((0, 0), (0, T_pad - T)))
        b3 = jnp.pad(b3, ((0, 0), (0, T_pad - T)))

    # --- choose the batch tile, pad the batch to a multiple of it -----------
    B_pad = _round_up(B, 8)
    bt = max(8, (min(batch_tile, B_pad) // 8) * 8)
    B_pad = _round_up(B_pad, bt)
    if B_pad != B:
        x = jnp.pad(x, ((0, B_pad - B), (0, 0)))

    # --- bf16 operands (f32 accumulation happens inside the kernel) ---------
    x_bf = x.astype(jnp.bfloat16)
    w1_bf = w1.astype(jnp.bfloat16)
    w2_bf = w2.astype(jnp.bfloat16)
    w3_bf = w3.astype(jnp.bfloat16)

    grid = (B_pad // bt,)

    def full(shape):
        return pl.BlockSpec(shape, lambda i: tuple(0 for _ in shape))

    out = pl.pallas_call(
        sdn_kernel,
        out_shape=jax.ShapeDtypeStruct((B_pad, T_pad), jnp.float32),
        grid_spec=pltpu.PrefetchScalarGridSpec(
            num_scalar_prefetch=0,
            grid=grid,
            in_specs=[
                pl.BlockSpec((bt, F_pad), lambda i: (i, 0)),  # x tile
                full((F_pad, H)),    # w1 (BN1 scale folded in)
                full((1, H)),        # bn1 bias
                full((H, H)),        # w2 (BN2 scale folded in)
                full((1, H)),        # bn2 bias
                full((H, T_pad)),    # w3
                full((1, T_pad)),    # b3
            ],
            out_specs=pl.BlockSpec((bt, T_pad), lambda i: (i, 0)),
        ),
        compiler_params=pltpu.CompilerParams(
            dimension_semantics=("parallel",)),
    )(x_bf, w1_bf, b1, w2_bf, b2, w3_bf, b3)

    return out[:B, :T]


def make_params(key, cnn_features_size, num_tags, hidden=512, eps=1e-5):
    """Deterministic synthetic parameters; BN folded into scale/bias, and the
    scale folded into the preceding bias-free Linear weight."""
    ks = jax.random.split(key, 12)
    f32 = jnp.float32

    def fold_bn(gamma, beta, mean, var):
        scale = gamma / jnp.sqrt(var + eps)
        bias = beta - mean * scale
        return scale.reshape(1, -1).astype(f32), bias.reshape(1, -1).astype(f32)

    # Linear weights stored as (in, out)  (PyTorch stores (out, in)).
    w1 = (jax.random.normal(ks[0], (cnn_features_size, hidden)) * 0.05).astype(f32)
    w2 = (jax.random.normal(ks[1], (hidden, hidden)) * 0.05).astype(f32)
    w3 = (jax.random.normal(ks[2], (hidden, num_tags)) * 0.05).astype(f32)
    b3 = (jax.random.normal(ks[3], (1, num_tags)) * 0.05).astype(f32)

    g1 = 1.0 + 0.1 * jax.random.normal(ks[4], (hidden,))
    be1 = 0.1 * jax.random.normal(ks[5], (hidden,))
    m1 = 0.1 * jax.random.normal(ks[6], (hidden,))
    v1 = 1.0 + 0.1 * jax.random.uniform(ks[7], (hidden,))

    g2 = 1.0 + 0.1 * jax.random.normal(ks[8], (hidden,))
    be2 = 0.1 * jax.random.normal(ks[9], (hidden,))
    m2 = 0.1 * jax.random.normal(ks[10], (hidden,))
    v2 = 1.0 + 0.1 * jax.random.uniform(ks[11], (hidden,))

    s1, b1 = fold_bn(g1, be1, m1, v1)
    s2, b2 = fold_bn(g2, be2, m2, v2)

    # (x @ W) * s + b  ==  x @ (W * s) + b   -> fold scale into the weights.
    w1 = w1 * s1
    w2 = w2 * s2

    return {"w1": w1, "b1": b1, "w2": w2, "b2": b2, "w3": w3, "b3": b3}


def sdn_reference(x, p):
    """Plain-JAX reference with the same bf16-operand / f32-accumulate math."""
    bf = jnp.bfloat16
    h1 = jnp.dot(x.astype(bf), p["w1"].astype(bf),
                 preferred_element_type=jnp.float32) + p["b1"]
    h1 = jnp.maximum(h1, 0.0)
    h2 = jnp.dot(h1.astype(bf), p["w2"].astype(bf),
                 preferred_element_type=jnp.float32) + p["b2"]
    h2 = jnp.maximum(h2, 0.0)
    logits = jnp.dot(h2.astype(bf), p["w3"].astype(bf),
                     preferred_element_type=jnp.float32) + p["b3"]
    return jax.nn.sigmoid(logits)


# TODO(synk): training-mode BatchNorm (batch statistics) and Dropout masks are
# not implemented; this kernel is the eval-mode forward pass.

if __name__ == "__main__":
    key = jax.random.PRNGKey(0)
    k_x, k_p = jax.random.split(key)

    # Small, intentionally non-aligned shapes to exercise the padding path:
    # batch 12 (pads to 16), features 300 (pads to 384), tags 100 (pads to 128).
    BATCH = 12
    CNN_FEATURES = 300
    NUM_TAGS = 100

    x = jax.random.normal(k_x, (BATCH, CNN_FEATURES), dtype=jnp.float32)
    params = make_params(k_p, CNN_FEATURES, NUM_TAGS)

    out = sdn_forward(x, params)           # adaptive tile -> single grid step
    out = jax.block_until_ready(out)

    ref = jax.block_until_ready(sdn_reference(x, params))
    assert out.shape == (BATCH, NUM_TAGS)
    # bf16 operands + approx reciprocal in the sigmoid -> modest tolerances.
    np.testing.assert_allclose(np.asarray(out), np.asarray(ref),
                               rtol=2e-2, atol=2e-3)
    print("KERNEL_OK")
</pallas_src>

<mosaic_0001>
module attributes {stable_mosaic.version = 11 : i64} {
  func.func @sdn_kernel(%arg0: i32, %arg1: memref<16x384xbf16, #tpu.memory_space<vmem>>, %arg2: memref<384x512xbf16, #tpu.memory_space<vmem>>, %arg3: memref<1x512xf32, #tpu.memory_space<vmem>>, %arg4: memref<512x512xbf16, #tpu.memory_space<vmem>>, %arg5: memref<1x512xf32, #tpu.memory_space<vmem>>, %arg6: memref<512x128xbf16, #tpu.memory_space<vmem>>, %arg7: memref<1x128xf32, #tpu.memory_space<vmem>>, %arg8: memref<16x128xf32, #tpu.memory_space<vmem>>) attributes {dimension_semantics = [#tpu.dimension_semantics<parallel>], iteration_bounds = array<i64: 1>, scalar_prefetch = 0 : i64, scratch_operands = 0 : i64, tpu.core_type = #tpu.core_type<tc>, window_params = [{transform_indices = @transform_0, window_bounds = array<i64: 16, 384>}, {pipeline_mode = #tpu.pipeline_mode<synchronous>, transform_indices = @transform_1, window_bounds = array<i64: 384, 512>}, {pipeline_mode = #tpu.pipeline_mode<synchronous>, transform_indices = @transform_2, window_bounds = array<i64: 1, 512>}, {pipeline_mode = #tpu.pipeline_mode<synchronous>, transform_indices = @transform_3, window_bounds = array<i64: 512, 512>}, {pipeline_mode = #tpu.pipeline_mode<synchronous>, transform_indices = @transform_4, window_bounds = array<i64: 1, 512>}, {pipeline_mode = #tpu.pipeline_mode<synchronous>, transform_indices = @transform_5, window_bounds = array<i64: 512, 128>}, {pipeline_mode = #tpu.pipeline_mode<synchronous>, transform_indices = @transform_6, window_bounds = array<i64: 1, 128>}, {transform_indices = @transform_7, window_bounds = array<i64: 16, 128>}]} {
    %c0 = arith.constant 0 : index
    %c0_0 = arith.constant 0 : index
    %0 = vector.load %arg1[%c0, %c0_0] : memref<16x384xbf16, #tpu.memory_space<vmem>>, vector<16x384xbf16>
    %c0_1 = arith.constant 0 : index
    %c0_2 = arith.constant 0 : index
    %1 = vector.load %arg2[%c0_1, %c0_2] : memref<384x512xbf16, #tpu.memory_space<vmem>>, vector<384x512xbf16>
    %cst = arith.constant dense<0.000000e+00> : vector<16x512xf32>
    %2 = tpu.matmul %0, %1, %cst {dimension_numbers = #tpu.dot_dimension_numbers<[1], [0], [0], [1], [0, 0, 1, 1], [], []>} : vector<16x384xbf16>, vector<384x512xbf16>, vector<16x512xf32> -> vector<16x512xf32>
    %c0_3 = arith.constant 0 : index
    %c0_4 = arith.constant 0 : index
    %3 = vector.load %arg3[%c0_3, %c0_4] : memref<1x512xf32, #tpu.memory_space<vmem>>, vector<1x512xf32>
    %4 = vector.broadcast %3 : vector<1x512xf32> to vector<16x512xf32>
    %5 = arith.addf %2, %4 : vector<16x512xf32>
    %cst_5 = arith.constant 0.000000e+00 : f32
    %6 = vector.broadcast %cst_5 : f32 to vector<16x512xf32>
    %7 = arith.maximumf %5, %6 : vector<16x512xf32>
    %8 = arith.truncf %7 : vector<16x512xf32> to vector<16x512xbf16>
    %c0_6 = arith.constant 0 : index
    %c0_7 = arith.constant 0 : index
    %9 = vector.load %arg4[%c0_6, %c0_7] : memref<512x512xbf16, #tpu.memory_space<vmem>>, vector<512x512xbf16>
    %cst_8 = arith.constant dense<0.000000e+00> : vector<16x512xf32>
    %10 = tpu.matmul %8, %9, %cst_8 {dimension_numbers = #tpu.dot_dimension_numbers<[1], [0], [0], [1], [0, 0, 1, 1], [], []>} : vector<16x512xbf16>, vector<512x512xbf16>, vector<16x512xf32> -> vector<16x512xf32>
    %c0_9 = arith.constant 0 : index
    %c0_10 = arith.constant 0 : index
    %11 = vector.load %arg5[%c0_9, %c0_10] : memref<1x512xf32, #tpu.memory_space<vmem>>, vector<1x512xf32>
    %12 = vector.broadcast %11 : vector<1x512xf32> to vector<16x512xf32>
    %13 = arith.addf %10, %12 : vector<16x512xf32>
    %cst_11 = arith.constant 0.000000e+00 : f32
    %14 = vector.broadcast %cst_11 : f32 to vector<16x512xf32>
    %15 = arith.maximumf %13, %14 : vector<16x512xf32>
    %16 = arith.truncf %15 : vector<16x512xf32> to vector<16x512xbf16>
    %c0_12 = arith.constant 0 : index
    %c0_13 = arith.constant 0 : index
    %17 = vector.load %arg6[%c0_12, %c0_13] : memref<512x128xbf16, #tpu.memory_space<vmem>>, vector<512x128xbf16>
    %cst_14 = arith.constant dense<0.000000e+00> : vector<16x128xf32>
    %18 = tpu.matmul %16, %17, %cst_14 {dimension_numbers = #tpu.dot_dimension_numbers<[1], [0], [0], [1], [0, 0, 1, 1], [], []>} : vector<16x512xbf16>, vector<512x128xbf16>, vector<16x128xf32> -> vector<16x128xf32>
    %c0_15 = arith.constant 0 : index
    %c0_16 = arith.constant 0 : index
    %19 = vector.load %arg7[%c0_15, %c0_16] : memref<1x128xf32, #tpu.memory_space<vmem>>, vector<1x128xf32>
    %20 = vector.broadcast %19 : vector<1x128xf32> to vector<16x128xf32>
    %21 = arith.addf %18, %20 : vector<16x128xf32>
    %cst_17 = arith.constant 0.000000e+00 : f32
    %22 = vector.broadcast %cst_17 : f32 to vector<16x128xf32>
    %23 = arith.subf %22, %21 : vector<16x128xf32>
    %24 = math.exp %23 : vector<16x128xf32>
    %cst_18 = arith.constant 1.000000e+00 : f32
    %25 = vector.broadcast %cst_18 : f32 to vector<16x128xf32>
    %26 = arith.addf %25, %24 : vector<16x128xf32>
    %27 = tpu.reciprocal %26 {approx = true} : vector<16x128xf32> -> vector<16x128xf32>
    %c0_19 = arith.constant 0 : index
    %c0_20 = arith.constant 0 : index
    %28 = vector.load %arg8[%c0_19, %c0_20] : memref<16x128xf32, #tpu.memory_space<vmem>>, vector<16x128xf32>
    tpu.vector_store %arg8[%c0_19, %c0_20], %27 {strides = array<i32>} : memref<16x128xf32, #tpu.memory_space<vmem>>, vector<16x128xf32>,
    return
  }
  func.func @transform_0(%arg0: i32) -> (i32, i32) {
    %c0_i32 = arith.constant 0 : i32
    %c0_i32_0 = arith.constant 0 : i32
    return %arg0, %c0_i32 : i32, i32
  }
  func.func @transform_1(%arg0: i32) -> (i32, i32) {
    %c0_i32 = arith.constant 0 : i32
    %c0_i32_0 = arith.constant 0 : i32
    %c0_i32_1 = arith.constant 0 : i32
    return %c0_i32, %c0_i32_0 : i32, i32
  }
  func.func @transform_2(%arg0: i32) -> (i32, i32) {
    %c0_i32 = arith.constant 0 : i32
    %c0_i32_0 = arith.constant 0 : i32
    %c0_i32_1 = arith.constant 0 : i32
    return %c0_i32, %c0_i32_0 : i32, i32
  }
  func.func @transform_3(%arg0: i32) -> (i32, i32) {
    %c0_i32 = arith.constant 0 : i32
    %c0_i32_0 = arith.constant 0 : i32
    %c0_i32_1 = arith.constant 0 : i32
    return %c0_i32, %c0_i32_0 : i32, i32
  }
  func.func @transform_4(%arg0: i32) -> (i32, i32) {
    %c0_i32 = arith.constant 0 : i32
    %c0_i32_0 = arith.constant 0 : i32
    %c0_i32_1 = arith.constant 0 : i32
    return %c0_i32, %c0_i32_0 : i32, i32
  }
  func.func @transform_5(%arg0: i32) -> (i32, i32) {
    %c0_i32 = arith.constant 0 : i32
    %c0_i32_0 = arith.constant 0 : i32
    %c0_i32_1 = arith.constant 0 : i32
    return %c0_i32, %c0_i32_0 : i32, i32
  }
  func.func @transform_6(%arg0: i32) -> (i32, i32) {
    %c0_i32 = arith.constant 0 : i32
    %c0_i32_0 = arith.constant 0 : i32
    %c0_i32_1 = arith.constant 0 : i32
    return %c0_i32, %c0_i32_0 : i32, i32
  }
  func.func @transform_7(%arg0: i32) -> (i32, i32) {
    %c0_i32 = arith.constant 0 : i32
    %c0_i32_0 = arith.constant 0 : i32
    return %arg0, %c0_i32 : i32, i32
  }
}

</mosaic_0001>

<llo_original>
// kernel: tpu_custom_call.1
$region0: #{tpu_custom_call.1}
  #allocation0 [shape = 'u32[]', space=smem, size = 0x4, offset = 0x4, fixed_abs, tag = 'smem constant byte address 0x4 - core index']
  #allocation1 [shape = 'u32[72,128]{1,0:T(1,128)}', space=vmem, size = 0x9000, scoped, tag = 'internal scratch']
  %s0 = inlined_call_operand.hbm [shape: bf16[16,384], index: 0, kind: input, shape index: {}]
  %s1 = inlined_call_operand.hbm [shape: bf16[384,512], index: 1, kind: input, shape index: {}]
  %s2 = inlined_call_operand.hbm [shape: f32[1,512], index: 2, kind: input, shape index: {}]
  %s3 = inlined_call_operand.hbm [shape: bf16[512,512], index: 3, kind: input, shape index: {}]
  %s4 = inlined_call_operand.hbm [shape: f32[1,512], index: 4, kind: input, shape index: {}]
  %s5 = inlined_call_operand.hbm [shape: bf16[512,128], index: 5, kind: input, shape index: {}]
  %s6 = inlined_call_operand.vmem [shape: f32[1,128], index: 6, kind: input, shape index: {}]
  %s7 = inlined_call_operand.hbm [shape: f32[16,128], index: 7, kind: output, shape index: {}]
  %s8 = sld [smem:[#allocation0]]
  $region62: #{tpu_custom_call.1} parent=0
    _
  %s10 = ssub.s32 1, %s8
  %s11 = scalar_select 0, %s10, %s8
  $region1: #{tpu_custom_call.1} parent=0
    #allocation2 [shape = 'u8[12288]{0}', space=vmem, size = 0x3000, scoped, tag = 'input window, operand 0, single buffered']
    #allocation3 [shape = 's32[1]{0}', space=sflag, size = 0x4, scoped, tag = 'scoped memory for tpu_custom_call.1']
    #allocation4 [shape = 's32[1]{0}', space=sflag, size = 0x4, scoped, tag = 'scoped memory for tpu_custom_call.1']
    #allocation5 [shape = 'u8[393216]{0}', space=vmem, size = 0x60000, scoped, tag = 'input window, operand 1, single buffered']
    #allocation6 [shape = 's32[1]{0}', space=sflag, size = 0x4, scoped, tag = 'scoped memory for tpu_custom_call.1']
    #allocation7 [shape = 'u8[2048]{0}', space=vmem, size = 0x800, scoped, tag = 'input window, operand 2, single buffered']
    #allocation8 [shape = 'u8[524288]{0}', space=vmem, size = 0x80000, scoped, tag = 'input window, operand 3, single buffered']
    #allocation9 [shape = 's32[1]{0}', space=sflag, size = 0x4, scoped, tag = 'scoped memory for tpu_custom_call.1']
    #allocation10 [shape = 'u8[2048]{0}', space=vmem, size = 0x800, scoped, tag = 'input window, operand 4, single buffered']
    #allocation11 [shape = 'u8[131072]{0}', space=vmem, size = 0x20000, scoped, tag = 'input window, operand 5, single buffered']
    #allocation12 [shape = 's32[1]{0}', space=sflag, size = 0x4, scoped, tag = 'scoped memory for tpu_custom_call.1']
    #allocation13 [shape = 'u8[8192]{0}', space=vmem, size = 0x2000, scoped, tag = 'output window, operand 0, single buffered']
    %12 = vsyncpa [#allocation3], 0
    %13 = vsyncpa [#allocation6], 0
    %14 = vsyncpa [#allocation9], 0
    %15 = vsyncpa [#allocation12], 0
    %16 = vsyncpa [#allocation4], 0
    // Predicated region
    $region2: #{tpu_custom_call.1} parent=1 // pred_check
      _
    $region3: #{tpu_custom_call.1} parent=1 // pred_check_branch
      %18 = sbr.rel (0) target = $region5
    $region4: #{tpu_custom_call.1} parent=1 // pred_region
      %20 = vsyncadd [#allocation3], 0
      %s21 = sshll.u32 %s0, 4
      %s22 = int_to_ptr.hbm [resolvable:$true] %s21
      %s23 = sshll.u32 [#allocation2], 4
      %s24 = int_to_ptr.vmem [resolvable:$true] %s23
      %29 = dma.hbm_to_vmem [thread:$0]  %s22, 384, %s24, [#allocation3], 192, 192, 12
    $region5: #{tpu_custom_call.1} parent=1 // pred_fallthru
      _
    // Predicated region
    $region6: #{tpu_custom_call.1} parent=1 // pred_check
      _
    $region7: #{tpu_custom_call.1} parent=1 // pred_check_branch
      %31 = sbr.rel (0) target = $region9
    $region8: #{tpu_custom_call.1} parent=1 // pred_region
      %33 = vsyncadd [#allocation6], 0
      %s34 = sshll.u32 %s1, 4
      %s35 = int_to_ptr.hbm [resolvable:$true] %s34
      %s36 = sshll.u32 [#allocation5], 4
      %s37 = int_to_ptr.vmem [resolvable:$true] %s36
      %42 = dma.hbm_to_vmem [thread:$0]  %s35, 12288, %s37, [#allocation6], 256, 256, 16
    $region9: #{tpu_custom_call.1} parent=1 // pred_fallthru
      _
    // Predicated region
    $region10: #{tpu_custom_call.1} parent=1 // pred_check
      _
    $region11: #{tpu_custom_call.1} parent=1 // pred_check_branch
      %44 = sbr.rel (0) target = $region13
    $region12: #{tpu_custom_call.1} parent=1 // pred_region
      %46 = vsyncadd [#allocation6], 0
      %s48 = sshll.u32 %s2, 4
      %s49 = int_to_ptr.hbm [resolvable:$true] %s48
      %s50 = sshll.u32 [#allocation7], 4
      %s51 = int_to_ptr.vmem [resolvable:$true] %s50
      %53 = dma.hbm_to_vmem [thread:$0]  %s49, 64, %s51, [#allocation6]
    $region13: #{tpu_custom_call.1} parent=1 // pred_fallthru
      _
    // Predicated region
    $region14: #{tpu_custom_call.1} parent=1 // pred_check
      _
    $region15: #{tpu_custom_call.1} parent=1 // pred_check_branch
      %55 = sbr.rel (0) target = $region17
    $region16: #{tpu_custom_call.1} parent=1 // pred_region
      %57 = vsyncadd [#allocation9], 0
      %s58 = sshll.u32 %s3, 4
      %s59 = int_to_ptr.hbm [resolvable:$true] %s58
      %s60 = sshll.u32 [#allocation8], 4
      %s61 = int_to_ptr.vmem [resolvable:$true] %s60
      %66 = dma.hbm_to_vmem [thread:$0]  %s59, 16384, %s61, [#allocation9], 256, 256, 16
    $region17: #{tpu_custom_call.1} parent=1 // pred_fallthru
      _
    // Predicated region
    $region18: #{tpu_custom_call.1} parent=1 // pred_check
      _
    $region19: #{tpu_custom_call.1} parent=1 // pred_check_branch
      %68 = sbr.rel (0) target = $region21
    $region20: #{tpu_custom_call.1} parent=1 // pred_region
      %70 = vsyncadd [#allocation9], 0
      %s72 = sshll.u32 %s4, 4
      %s73 = int_to_ptr.hbm [resolvable:$true] %s72
      %s74 = sshll.u32 [#allocation10], 4
      %s75 = int_to_ptr.vmem [resolvable:$true] %s74
      %77 = dma.hbm_to_vmem [thread:$0]  %s73, 64, %s75, [#allocation9]
    $region21: #{tpu_custom_call.1} parent=1 // pred_fallthru
      _
    // Predicated region
    $region22: #{tpu_custom_call.1} parent=1 // pred_check
      _
    $region23: #{tpu_custom_call.1} parent=1 // pred_check_branch
      %79 = sbr.rel (0) target = $region25
    $region24: #{tpu_custom_call.1} parent=1 // pred_region
      %81 = vsyncadd [#allocation12], 0
      %s82 = sshll.u32 %s5, 4
      %s83 = int_to_ptr.hbm [resolvable:$true] %s82
      %s84 = sshll.u32 [#allocation11], 4
      %s85 = int_to_ptr.vmem [resolvable:$true] %s84
      %90 = dma.hbm_to_vmem [thread:$0]  %s83, 4096, %s85, [#allocation12], 64, 64, 4
    $region25: #{tpu_custom_call.1} parent=1 // pred_fallthru
      _
    // Predicated region
    $region26: #{tpu_custom_call.1} parent=1 // pred_check
      _
    $region27: #{tpu_custom_call.1} parent=1 // pred_check_branch
      %92 = sbr.rel (0) target = $region29
    $region28: #{tpu_custom_call.1} parent=1 // pred_region
      _
    $region29: #{tpu_custom_call.1} parent=1 // pred_fallthru
      _
    // Predicated region
    $region30: #{tpu_custom_call.1} parent=1 // pred_check
      _
    $region31: #{tpu_custom_call.1} parent=1 // pred_check_branch
      %94 = sbr.rel (0) target = $region33
    $region32: #{tpu_custom_call.1} parent=1 // pred_region
      %96 = dma.done [#allocation3], 384
    $region33: #{tpu_custom_call.1} parent=1 // pred_fallthru
      _
    // Predicated region
    $region34: #{tpu_custom_call.1} parent=1 // pred_check
      _
    $region35: #{tpu_custom_call.1} parent=1 // pred_check_branch
      %98 = sbr.rel (0) target = $region37
    $region36: #{tpu_custom_call.1} parent=1 // pred_region
      %100 = dma.done [#allocation6], 12288
    $region37: #{tpu_custom_call.1} parent=1 // pred_fallthru
      _
    // Predicated region
    $region38: #{tpu_custom_call.1} parent=1 // pred_check
      _
    $region39: #{tpu_custom_call.1} parent=1 // pred_check_branch
      %102 = sbr.rel (0) target = $region41
    $region40: #{tpu_custom_call.1} parent=1 // pred_region
      %104 = dma.done [#allocation6], 64
    $region41: #{tpu_custom_call.1} parent=1 // pred_fallthru
      _
    // Predicated region
    $region42: #{tpu_custom_call.1} parent=1 // pred_check
      _
    $region43: #{tpu_custom_call.1} parent=1 // pred_check_branch
      %106 = sbr.rel (0) target = $region45
    $region44: #{tpu_custom_call.1} parent=1 // pred_region
      %108 = dma.done [#allocation9], 16384
    $region45: #{tpu_custom_call.1} parent=1 // pred_fallthru
      _
    // Predicated region
    $region46: #{tpu_custom_call.1} parent=1 // pred_check
      _
    $region47: #{tpu_custom_call.1} parent=1 // pred_check_branch
      %110 = sbr.rel (0) target = $region49
    $region48: #{tpu_custom_call.1} parent=1 // pred_region
      %112 = dma.done [#allocation9], 64
    $region49: #{tpu_custom_call.1} parent=1 // pred_fallthru
      _
    // Predicated region
    $region50: #{tpu_custom_call.1} parent=1 // pred_check
      _
    $region51: #{tpu_custom_call.1} parent=1 // pred_check_branch
      %114 = sbr.rel (0) target = $region53
    $region52: #{tpu_custom_call.1} parent=1 // pred_region
      %116 = dma.done [#allocation12], 4096
    $region53: #{tpu_custom_call.1} parent=1 // pred_fallthru
      _
    %v117 = vld [vmem:[#allocation2] sm:$0xff]
    %v118 = vld [vmem:[#allocation2 + $0x8] sm:$0xf]
    %v119 = vld [vmem:[#allocation2 + $0xc] sm:$0xff]
    %v120 = vld [vmem:[#allocation2 + $0x14] sm:$0xf]
    %v121 = vld [vmem:[#allocation5] sm:$0xff]
    %v122 = vld [vmem:[#allocation5 + $0x8] sm:$0xff]
    %v123 = vld [vmem:[#allocation5 + $0x10] sm:$0xff]
    %v124 = vld [vmem:[#allocation5 + $0x18] sm:$0xff]
    %v125 = vld [vmem:[#allocation5 + $0x20] sm:$0xff]
    %v126 = vld [vmem:[#allocation5 + $0x28] sm:$0xff]
    %v127 = vld [vmem:[#allocation5 + $0x30] sm:$0xff]
    %v128 = vld [vmem:[#allocation5 + $0x38] sm:$0xff]
    %v129 = vld [vmem:[#allocation5 + $0x40] sm:$0xff]
    %v130 = vld [vmem:[#allocation5 + $0x48] sm:$0xff]
    %v131 = vld [vmem:[#allocation5 + $0x50] sm:$0xff]
    %v132 = vld [vmem:[#allocation5 + $0x58] sm:$0xff]
    %v133 = vld [vmem:[#allocation5 + $0x60] sm:$0xff]
    %v134 = vld [vmem:[#allocation5 + $0x68] sm:$0xff]
    %v135 = vld [vmem:[#allocation5 + $0x70] sm:$0xff]
    %v136 = vld [vmem:[#allocation5 + $0x78] sm:$0xff]
    %v137 = vld [vmem:[#allocation5 + $0x80] sm:$0xff]
    %v138 = vld [vmem:[#allocation5 + $0x88] sm:$0xff]
    %v139 = vld [vmem:[#allocation5 + $0x90] sm:$0xff]
    %v140 = vld [vmem:[#allocation5 + $0x98] sm:$0xff]
    %v141 = vld [vmem:[#allocation5 + $0xa0] sm:$0xff]
    %v142 = vld [vmem:[#allocation5 + $0xa8] sm:$0xff]
    %v143 = vld [vmem:[#allocation5 + $0xb0] sm:$0xff]
    %v144 = vld [vmem:[#allocation5 + $0xb8] sm:$0xff]
    %v145 = vld [vmem:[#allocation5 + $0xc0] sm:$0xff]
    %v146 = vld [vmem:[#allocation5 + $0xc8] sm:$0xff]
    %v147 = vld [vmem:[#allocation5 + $0xd0] sm:$0xff]
    %v148 = vld [vmem:[#allocation5 + $0xd8] sm:$0xff]
    %v149 = vld [vmem:[#allocation5 + $0xe0] sm:$0xff]
    %v150 = vld [vmem:[#allocation5 + $0xe8] sm:$0xff]
    %v151 = vld [vmem:[#allocation5 + $0xf0] sm:$0xff]
    %v152 = vld [vmem:[#allocation5 + $0xf8] sm:$0xff]
    %v153 = vld [vmem:[#allocation5 + $0x100] sm:$0xff]
    %v154 = vld [vmem:[#allocation5 + $0x108] sm:$0xff]
    %v155 = vld [vmem:[#allocation5 + $0x110] sm:$0xff]
    %v156 = vld [vmem:[#allocation5 + $0x118] sm:$0xff]
    %v157 = vld [vmem:[#allocation5 + $0x120] sm:$0xff]
    %v158 = vld [vmem:[#allocation5 + $0x128] sm:$0xff]
    %v159 = vld [vmem:[#allocation5 + $0x130] sm:$0xff]
    %v160 = vld [vmem:[#allocation5 + $0x138] sm:$0xff]
    %v161 = vld [vmem:[#allocation5 + $0x140] sm:$0xff]
    %v162 = vld [vmem:[#allocation5 + $0x148] sm:$0xff]
    %v163 = vld [vmem:[#allocation5 + $0x150] sm:$0xff]
    %v164 = vld [vmem:[#allocation5 + $0x158] sm:$0xff]
    %v165 = vld [vmem:[#allocation5 + $0x160] sm:$0xff]
    %v166 = vld [vmem:[#allocation5 + $0x168] sm:$0xff]
    %v167 = vld [vmem:[#allocation5 + $0x170] sm:$0xff]
    %v168 = vld [vmem:[#allocation5 + $0x178] sm:$0xff]
    %v169 = vld [vmem:[#allocation5 + $0x180] sm:$0xff]
    %v170 = vld [vmem:[#allocation5 + $0x188] sm:$0xff]
    %v171 = vld [vmem:[#allocation5 + $0x190] sm:$0xff]
    %v172 = vld [vmem:[#allocation5 + $0x198] sm:$0xff]
    %v173 = vld [vmem:[#allocation5 + $0x1a0] sm:$0xff]
    %v174 = vld [vmem:[#allocation5 + $0x1a8] sm:$0xff]
    %v175 = vld [vmem:[#allocation5 + $0x1b0] sm:$0xff]
    %v176 = vld [vmem:[#allocation5 + $0x1b8] sm:$0xff]
    %v177 = vld [vmem:[#allocation5 + $0x1c0] sm:$0xff]
    %v178 = vld [vmem:[#allocation5 + $0x1c8] sm:$0xff]
    %v179 = vld [vmem:[#allocation5 + $0x1d0] sm:$0xff]
    %v180 = vld [vmem:[#allocation5 + $0x1d8] sm:$0xff]
    %v181 = vld [vmem:[#allocation5 + $0x1e0] sm:$0xff]
    %v182 = vld [vmem:[#allocation5 + $0x1e8] sm:$0xff]
    %v183 = vld [vmem:[#allocation5 + $0x1f0] sm:$0xff]
    %v184 = vld [vmem:[#allocation5 + $0x1f8] sm:$0xff]
    %v185 = vld [vmem:[#allocation5 + $0x200] sm:$0xff]
    %v186 = vld [vmem:[#allocation5 + $0x208] sm:$0xff]
    %v187 = vld [vmem:[#allocation5 + $0x210] sm:$0xff]
    %v188 = vld [vmem:[#allocation5 + $0x218] sm:$0xff]
    %v189 = vld [vmem:[#allocation5 + $0x220] sm:$0xff]
    %v190 = vld [vmem:[#allocation5 + $0x228] sm:$0xff]
    %v191 = vld [vmem:[#allocation5 + $0x230] sm:$0xff]
    %v192 = vld [vmem:[#allocation5 + $0x238] sm:$0xff]
    %v193 = vld [vmem:[#allocation5 + $0x240] sm:$0xff]
    %v194 = vld [vmem:[#allocation5 + $0x248] sm:$0xff]
    %v195 = vld [vmem:[#allocation5 + $0x250] sm:$0xff]
    %v196 = vld [vmem:[#allocation5 + $0x258] sm:$0xff]
    %v197 = vld [vmem:[#allocation5 + $0x260] sm:$0xff]
    %v198 = vld [vmem:[#allocation5 + $0x268] sm:$0xff]
    %v199 = vld [vmem:[#allocation5 + $0x270] sm:$0xff]
    %v200 = vld [vmem:[#allocation5 + $0x278] sm:$0xff]
    %v201 = vld [vmem:[#allocation5 + $0x280] sm:$0xff]
    %v202 = vld [vmem:[#allocation5 + $0x288] sm:$0xff]
    %v203 = vld [vmem:[#allocation5 + $0x290] sm:$0xff]
    %v204 = vld [vmem:[#allocation5 + $0x298] sm:$0xff]
    %v205 = vld [vmem:[#allocation5 + $0x2a0] sm:$0xff]
    %v206 = vld [vmem:[#allocation5 + $0x2a8] sm:$0xff]
    %v207 = vld [vmem:[#allocation5 + $0x2b0] sm:$0xff]
    %v208 = vld [vmem:[#allocation5 + $0x2b8] sm:$0xff]
    %v209 = vld [vmem:[#allocation5 + $0x2c0] sm:$0xff]
    %v210 = vld [vmem:[#allocation5 + $0x2c8] sm:$0xff]
    %v211 = vld [vmem:[#allocation5 + $0x2d0] sm:$0xff]
    %v212 = vld [vmem:[#allocation5 + $0x2d8] sm:$0xff]
    %v213 = vld [vmem:[#allocation5 + $0x2e0] sm:$0xff]
    %v214 = vld [vmem:[#allocation5 + $0x2e8] sm:$0xff]
    %v215 = vld [vmem:[#allocation5 + $0x2f0] sm:$0xff]
    %v216 = vld [vmem:[#allocation5 + $0x2f8] sm:$0xff]
    %v217 = vld [vmem:[#allocation7] sm:$0xf]
    %v219 = vperm.slane %v217, 0
    %v220 = vperm.slane %v217, 1
    %v221 = vperm.slane %v217, 2
    %v222 = vperm.slane %v217, 3
    %v231 = vunpack.c.l.b16 %v117
    %v232 = vunpack.c.h.b16 %v117
    %v233 = vunpack.c.l.b16 %v118
    %v234 = vunpack.c.l.b16 %v119
    %v235 = vunpack.c.h.b16 %v119
    %v236 = vunpack.c.l.b16 %v120
    %v237 = vpack.c.b16 %v234, %v231
    %v238 = vpack.c.b16 %v235, %v232
    %v239 = vpack.c.b16 %v236, %v233
    %v339 = vunpack.c.l.b16 %v121
    %v340 = vunpack.c.h.b16 %v121
    %v341 = vunpack.c.l.b16 %v122
    %v342 = vunpack.c.h.b16 %v122
    %v343 = vunpack.c.l.b16 %v123
    %v344 = vunpack.c.h.b16 %v123
    %v345 = vunpack.c.l.b16 %v124
    %v346 = vunpack.c.h.b16 %v124
    %v347 = vunpack.c.l.b16 %v125
    %v348 = vunpack.c.h.b16 %v125
    %v349 = vunpack.c.l.b16 %v126
    %v350 = vunpack.c.h.b16 %v126
    %v351 = vunpack.c.l.b16 %v127
    %v352 = vunpack.c.h.b16 %v127
    %v353 = vunpack.c.l.b16 %v128
    %v354 = vunpack.c.h.b16 %v128
    %v355 = vunpack.c.l.b16 %v129
    %v356 = vunpack.c.h.b16 %v129
    %v357 = vunpack.c.l.b16 %v130
    %v358 = vunpack.c.h.b16 %v130
    %v359 = vunpack.c.l.b16 %v131
    %v360 = vunpack.c.h.b16 %v131
    %v361 = vunpack.c.l.b16 %v132
    %v362 = vunpack.c.h.b16 %v132
    %v363 = vunpack.c.l.b16 %v133
    %v364 = vunpack.c.h.b16 %v133
    %v365 = vunpack.c.l.b16 %v134
    %v366 = vunpack.c.h.b16 %v134
    %v367 = vunpack.c.l.b16 %v135
    %v368 = vunpack.c.h.b16 %v135
    %v369 = vunpack.c.l.b16 %v136
    %v370 = vunpack.c.h.b16 %v136
    %v371 = vunpack.c.l.b16 %v137
    %v372 = vunpack.c.h.b16 %v137
    %v373 = vunpack.c.l.b16 %v138
    %v374 = vunpack.c.h.b16 %v138
    %v375 = vunpack.c.l.b16 %v139
    %v376 = vunpack.c.h.b16 %v139
    %v377 = vunpack.c.l.b16 %v140
    %v378 = vunpack.c.h.b16 %v140
    %v379 = vunpack.c.l.b16 %v141
    %v380 = vunpack.c.h.b16 %v141
    %v381 = vunpack.c.l.b16 %v142
    %v382 = vunpack.c.h.b16 %v142
    %v383 = vunpack.c.l.b16 %v143
    %v384 = vunpack.c.h.b16 %v143
    %v385 = vunpack.c.l.b16 %v144
    %v386 = vunpack.c.h.b16 %v144
    %v387 = vunpack.c.l.b16 %v145
    %v388 = vunpack.c.h.b16 %v145
    %v389 = vunpack.c.l.b16 %v146
    %v390 = vunpack.c.h.b16 %v146
    %v391 = vunpack.c.l.b16 %v147
    %v392 = vunpack.c.h.b16 %v147
    %v393 = vunpack.c.l.b16 %v148
    %v394 = vunpack.c.h.b16 %v148
    %v395 = vunpack.c.l.b16 %v149
    %v396 = vunpack.c.h.b16 %v149
    %v397 = vunpack.c.l.b16 %v150
    %v398 = vunpack.c.h.b16 %v150
    %v399 = vunpack.c.l.b16 %v151
    %v400 = vunpack.c.h.b16 %v151
    %v401 = vunpack.c.l.b16 %v152
    %v402 = vunpack.c.h.b16 %v152
    %v403 = vunpack.c.l.b16 %v153
    %v404 = vunpack.c.h.b16 %v153
    %v405 = vunpack.c.l.b16 %v154
    %v406 = vunpack.c.h.b16 %v154
    %v407 = vunpack.c.l.b16 %v155
    %v408 = vunpack.c.h.b16 %v155
    %v409 = vunpack.c.l.b16 %v156
    %v410 = vunpack.c.h.b16 %v156
    %v411 = vunpack.c.l.b16 %v157
    %v412 = vunpack.c.h.b16 %v157
    %v413 = vunpack.c.l.b16 %v158
    %v414 = vunpack.c.h.b16 %v158
    %v415 = vunpack.c.l.b16 %v159
    %v416 = vunpack.c.h.b16 %v159
    %v417 = vunpack.c.l.b16 %v160
    %v418 = vunpack.c.h.b16 %v160
    %v419 = vunpack.c.l.b16 %v161
    %v420 = vunpack.c.h.b16 %v161
    %v421 = vunpack.c.l.b16 %v162
    %v422 = vunpack.c.h.b16 %v162
    %v423 = vunpack.c.l.b16 %v163
    %v424 = vunpack.c.h.b16 %v163
    %v425 = vunpack.c.l.b16 %v164
    %v426 = vunpack.c.h.b16 %v164
    %v427 = vunpack.c.l.b16 %v165
    %v428 = vunpack.c.h.b16 %v165
    %v429 = vunpack.c.l.b16 %v166
    %v430 = vunpack.c.h.b16 %v166
    %v431 = vunpack.c.l.b16 %v167
    %v432 = vunpack.c.h.b16 %v167
    %v433 = vunpack.c.l.b16 %v168
    %v434 = vunpack.c.h.b16 %v168
    %v435 = vunpack.c.l.b16 %v169
    %v436 = vunpack.c.h.b16 %v169
    %v437 = vunpack.c.l.b16 %v170
    %v438 = vunpack.c.h.b16 %v170
    %v439 = vunpack.c.l.b16 %v171
    %v440 = vunpack.c.h.b16 %v171
    %v441 = vunpack.c.l.b16 %v172
    %v442 = vunpack.c.h.b16 %v172
    %v443 = vunpack.c.l.b16 %v173
    %v444 = vunpack.c.h.b16 %v173
    %v445 = vunpack.c.l.b16 %v174
    %v446 = vunpack.c.h.b16 %v174
    %v447 = vunpack.c.l.b16 %v175
    %v448 = vunpack.c.h.b16 %v175
    %v449 = vunpack.c.l.b16 %v176
    %v450 = vunpack.c.h.b16 %v176
    %v451 = vunpack.c.l.b16 %v177
    %v452 = vunpack.c.h.b16 %v177
    %v453 = vunpack.c.l.b16 %v178
    %v454 = vunpack.c.h.b16 %v178
    %v455 = vunpack.c.l.b16 %v179
    %v456 = vunpack.c.h.b16 %v179
    %v457 = vunpack.c.l.b16 %v180
    %v458 = vunpack.c.h.b16 %v180
    %v459 = vunpack.c.l.b16 %v181
    %v460 = vunpack.c.h.b16 %v181
    %v461 = vunpack.c.l.b16 %v182
    %v462 = vunpack.c.h.b16 %v182
    %v463 = vunpack.c.l.b16 %v183
    %v464 = vunpack.c.h.b16 %v183
    %v465 = vunpack.c.l.b16 %v184
    %v466 = vunpack.c.h.b16 %v184
    %v467 = vunpack.c.l.b16 %v185
    %v468 = vunpack.c.h.b16 %v185
    %v469 = vunpack.c.l.b16 %v186
    %v470 = vunpack.c.h.b16 %v186
    %v471 = vunpack.c.l.b16 %v187
    %v472 = vunpack.c.h.b16 %v187
    %v473 = vunpack.c.l.b16 %v188
    %v474 = vunpack.c.h.b16 %v188
    %v475 = vunpack.c.l.b16 %v189
    %v476 = vunpack.c.h.b16 %v189
    %v477 = vunpack.c.l.b16 %v190
    %v478 = vunpack.c.h.b16 %v190
    %v479 = vunpack.c.l.b16 %v191
    %v480 = vunpack.c.h.b16 %v191
    %v481 = vunpack.c.l.b16 %v192
    %v482 = vunpack.c.h.b16 %v192
    %v483 = vunpack.c.l.b16 %v193
    %v484 = vunpack.c.h.b16 %v193
    %v485 = vunpack.c.l.b16 %v194
    %v486 = vunpack.c.h.b16 %v194
    %v487 = vunpack.c.l.b16 %v195
    %v488 = vunpack.c.h.b16 %v195
    %v489 = vunpack.c.l.b16 %v196
    %v490 = vunpack.c.h.b16 %v196
    %v491 = vunpack.c.l.b16 %v197
    %v492 = vunpack.c.h.b16 %v197
    %v493 = vunpack.c.l.b16 %v198
    %v494 = vunpack.c.h.b16 %v198
    %v495 = vunpack.c.l.b16 %v199
    %v496 = vunpack.c.h.b16 %v199
    %v497 = vunpack.c.l.b16 %v200
    %v498 = vunpack.c.h.b16 %v200
    %v499 = vunpack.c.l.b16 %v201
    %v500 = vunpack.c.h.b16 %v201
    %v501 = vunpack.c.l.b16 %v202
    %v502 = vunpack.c.h.b16 %v202
    %v503 = vunpack.c.l.b16 %v203
    %v504 = vunpack.c.h.b16 %v203
    %v505 = vunpack.c.l.b16 %v204
    %v506 = vunpack.c.h.b16 %v204
    %v507 = vunpack.c.l.b16 %v205
    %v508 = vunpack.c.h.b16 %v205
    %v509 = vunpack.c.l.b16 %v206
    %v510 = vunpack.c.h.b16 %v206
    %v511 = vunpack.c.l.b16 %v207
    %v512 = vunpack.c.h.b16 %v207
    %v513 = vunpack.c.l.b16 %v208
    %v514 = vunpack.c.h.b16 %v208
    %v515 = vunpack.c.l.b16 %v209
    %v516 = vunpack.c.h.b16 %v209
    %v517 = vunpack.c.l.b16 %v210
    %v518 = vunpack.c.h.b16 %v210
    %v519 = vunpack.c.l.b16 %v211
    %v520 = vunpack.c.h.b16 %v211
    %v521 = vunpack.c.l.b16 %v212
    %v522 = vunpack.c.h.b16 %v212
    %v523 = vunpack.c.l.b16 %v213
    %v524 = vunpack.c.h.b16 %v213
    %v525 = vunpack.c.l.b16 %v214
    %v526 = vunpack.c.h.b16 %v214
    %v527 = vunpack.c.l.b16 %v215
    %v528 = vunpack.c.h.b16 %v215
    %v529 = vunpack.c.l.b16 %v216
    %v530 = vunpack.c.h.b16 %v216
    %v531 = vpack.c.b16 %v343, %v339
    %v532 = vpack.c.b16 %v344, %v340
    %v533 = vpack.c.b16 %v345, %v341
    %v534 = vpack.c.b16 %v346, %v342
    %v535 = vpack.c.b16 %v351, %v347
    %v536 = vpack.c.b16 %v352, %v348
    %v537 = vpack.c.b16 %v353, %v349
    %v538 = vpack.c.b16 %v354, %v350
    %v539 = vpack.c.b16 %v359, %v355
    %v540 = vpack.c.b16 %v360, %v356
    %v541 = vpack.c.b16 %v361, %v357
    %v542 = vpack.c.b16 %v362, %v358
    %v543 = vpack.c.b16 %v367, %v363
    %v544 = vpack.c.b16 %v368, %v364
    %v545 = vpack.c.b16 %v369, %v365
    %v546 = vpack.c.b16 %v370, %v366
    %v547 = vpack.c.b16 %v375, %v371
    %v548 = vpack.c.b16 %v376, %v372
    %v549 = vpack.c.b16 %v377, %v373
    %v550 = vpack.c.b16 %v378, %v374
    %v551 = vpack.c.b16 %v383, %v379
    %v552 = vpack.c.b16 %v384, %v380
    %v553 = vpack.c.b16 %v385, %v381
    %v554 = vpack.c.b16 %v386, %v382
    %v555 = vpack.c.b16 %v391, %v387
    %v556 = vpack.c.b16 %v392, %v388
    %v557 = vpack.c.b16 %v393, %v389
    %v558 = vpack.c.b16 %v394, %v390
    %v559 = vpack.c.b16 %v399, %v395
    %v560 = vpack.c.b16 %v400, %v396
    %v561 = vpack.c.b16 %v401, %v397
    %v562 = vpack.c.b16 %v402, %v398
    %v563 = vpack.c.b16 %v407, %v403
    %v564 = vpack.c.b16 %v408, %v404
    %v565 = vpack.c.b16 %v409, %v405
    %v566 = vpack.c.b16 %v410, %v406
    %v567 = vpack.c.b16 %v415, %v411
    %v568 = vpack.c.b16 %v416, %v412
    %v569 = vpack.c.b16 %v417, %v413
    %v570 = vpack.c.b16 %v418, %v414
    %v571 = vpack.c.b16 %v423, %v419
    %v572 = vpack.c.b16 %v424, %v420
    %v573 = vpack.c.b16 %v425, %v421
    %v574 = vpack.c.b16 %v426, %v422
    %v575 = vpack.c.b16 %v431, %v427
    %v576 = vpack.c.b16 %v432, %v428
    %v577 = vpack.c.b16 %v433, %v429
    %v578 = vpack.c.b16 %v434, %v430
    %v579 = vpack.c.b16 %v439, %v435
    %v580 = vpack.c.b16 %v440, %v436
    %v581 = vpack.c.b16 %v441, %v437
    %v582 = vpack.c.b16 %v442, %v438
    %v583 = vpack.c.b16 %v447, %v443
    %v584 = vpack.c.b16 %v448, %v444
    %v585 = vpack.c.b16 %v449, %v445
    %v586 = vpack.c.b16 %v450, %v446
    %v587 = vpack.c.b16 %v455, %v451
    %v588 = vpack.c.b16 %v456, %v452
    %v589 = vpack.c.b16 %v457, %v453
    %v590 = vpack.c.b16 %v458, %v454
    %v591 = vpack.c.b16 %v463, %v459
    %v592 = vpack.c.b16 %v464, %v460
    %v593 = vpack.c.b16 %v465, %v461
    %v594 = vpack.c.b16 %v466, %v462
    %v595 = vpack.c.b16 %v471, %v467
    %v596 = vpack.c.b16 %v472, %v468
    %v597 = vpack.c.b16 %v473, %v469
    %v598 = vpack.c.b16 %v474, %v470
    %v599 = vpack.c.b16 %v479, %v475
    %v600 = vpack.c.b16 %v480, %v476
    %v601 = vpack.c.b16 %v481, %v477
    %v602 = vpack.c.b16 %v482, %v478
    %v603 = vpack.c.b16 %v487, %v483
    %v604 = vpack.c.b16 %v488, %v484
    %v605 = vpack.c.b16 %v489, %v485
    %v606 = vpack.c.b16 %v490, %v486
    %v607 = vpack.c.b16 %v495, %v491
    %v608 = vpack.c.b16 %v496, %v492
    %v609 = vpack.c.b16 %v497, %v493
    %v610 = vpack.c.b16 %v498, %v494
    %v611 = vpack.c.b16 %v503, %v499
    %v612 = vpack.c.b16 %v504, %v500
    %v613 = vpack.c.b16 %v505, %v501
    %v614 = vpack.c.b16 %v506, %v502
    %v615 = vpack.c.b16 %v511, %v507
    %v616 = vpack.c.b16 %v512, %v508
    %v617 = vpack.c.b16 %v513, %v509
    %v618 = vpack.c.b16 %v514, %v510
    %v619 = vpack.c.b16 %v519, %v515
    %v620 = vpack.c.b16 %v520, %v516
    %v621 = vpack.c.b16 %v521, %v517
    %v622 = vpack.c.b16 %v522, %v518
    %v623 = vpack.c.b16 %v527, %v523
    %v624 = vpack.c.b16 %v528, %v524
    %v625 = vpack.c.b16 %v529, %v525
    %v626 = vpack.c.b16 %v530, %v526
    %723 = vmatpush.bf16.msra.mxu0 %v559
    %724 = vmatpush.bf16.msra.mxu0 %v555
    %725 = vmatpush.bf16.msra.mxu0 %v551
    %726 = vmatpush.bf16.msra.mxu0 %v547
    %727 = vmatpush.bf16.msra.mxu0 %v543
    %728 = vmatpush.bf16.msra.mxu0 %v539
    %729 = vmatpush.bf16.msra.mxu0 %v535
    %730 = vmatpush.bf16.msra.mxu0 %v531
    %731 = vmatmul.bf16.gmra.mxu0 %v237
    %v732 = vpop.f32.mrf.mxu0
    %v733 = vadd.f32 %v219, %v732
    %v734 = vpop.f32.mrf.mxu0
    %v735 = vadd.f32 %v219, %v734
    %736 = vdwg.mxu0
    %737 = vmatpush.bf16.msra.mxu0 %v591
    %738 = vmatpush.bf16.msra.mxu0 %v587
    %739 = vmatpush.bf16.msra.mxu0 %v583
    %740 = vmatpush.bf16.msra.mxu0 %v579
    %741 = vmatpush.bf16.msra.mxu0 %v575
    %742 = vmatpush.bf16.msra.mxu0 %v571
    %743 = vmatpush.bf16.msra.mxu0 %v567
    %744 = vmatpush.bf16.msra.mxu0 %v563
    %745 = vmatmul.bf16.gmra.mxu0 %v238
    %v746 = vpop.f32.mrf.mxu0
    %v747 = vadd.f32 %v733, %v746
    %v748 = vpop.f32.mrf.mxu0
    %v749 = vadd.f32 %v735, %v748
    %750 = vdwg.mxu0
    %751 = vmatpush.bf16.msra.mxu0 %v623
    %752 = vmatpush.bf16.msra.mxu0 %v619
    %753 = vmatpush.bf16.msra.mxu0 %v615
    %754 = vmatpush.bf16.msra.mxu0 %v611
    %755 = vmatpush.bf16.msra.mxu0 %v607
    %756 = vmatpush.bf16.msra.mxu0 %v603
    %757 = vmatpush.bf16.msra.mxu0 %v599
    %758 = vmatpush.bf16.msra.mxu0 %v595
    %759 = vmatmul.bf16.gmra.mxu0 %v239
    %v760 = vpop.f32.mrf.mxu0
    %v761 = vadd.f32 %v747, %v760
    %v762 = vpop.f32.mrf.mxu0
    %v763 = vadd.f32 %v749, %v762
    %764 = vdwg.mxu0
    %765 = vmatpush.bf16.msra.mxu0 %v560
    %766 = vmatpush.bf16.msra.mxu0 %v556
    %767 = vmatpush.bf16.msra.mxu0 %v552
    %768 = vmatpush.bf16.msra.mxu0 %v548
    %769 = vmatpush.bf16.msra.mxu0 %v544
    %770 = vmatpush.bf16.msra.mxu0 %v540
    %771 = vmatpush.bf16.msra.mxu0 %v536
    %772 = vmatpush.bf16.msra.mxu0 %v532
    %773 = vmatmul.bf16.gmra.mxu0 %v237
    %v774 = vpop.f32.mrf.mxu0
    %v775 = vadd.f32 %v220, %v774
    %v776 = vpop.f32.mrf.mxu0
    %v777 = vadd.f32 %v220, %v776
    %778 = vdwg.mxu0
    %779 = vmatpush.bf16.msra.mxu0 %v592
    %780 = vmatpush.bf16.msra.mxu0 %v588
    %781 = vmatpush.bf16.msra.mxu0 %v584
    %782 = vmatpush.bf16.msra.mxu0 %v580
    %783 = vmatpush.bf16.msra.mxu0 %v576
    %784 = vmatpush.bf16.msra.mxu0 %v572
    %785 = vmatpush.bf16.msra.mxu0 %v568
    %786 = vmatpush.bf16.msra.mxu0 %v564
    %787 = vmatmul.bf16.gmra.mxu0 %v238
    %v788 = vpop.f32.mrf.mxu0
    %v789 = vadd.f32 %v775, %v788
    %v790 = vpop.f32.mrf.mxu0
    %v791 = vadd.f32 %v777, %v790
    %792 = vdwg.mxu0
    %793 = vmatpush.bf16.msra.mxu0 %v624
    %794 = vmatpush.bf16.msra.mxu0 %v620
    %795 = vmatpush.bf16.msra.mxu0 %v616
    %796 = vmatpush.bf16.msra.mxu0 %v612
    %797 = vmatpush.bf16.msra.mxu0 %v608
    %798 = vmatpush.bf16.msra.mxu0 %v604
    %799 = vmatpush.bf16.msra.mxu0 %v600
    %800 = vmatpush.bf16.msra.mxu0 %v596
    %801 = vmatmul.bf16.gmra.mxu0 %v239
    %v802 = vpop.f32.mrf.mxu0
    %v803 = vadd.f32 %v789, %v802
    %v804 = vpop.f32.mrf.mxu0
    %v805 = vadd.f32 %v791, %v804
    %806 = vdwg.mxu0
    %807 = vmatpush.bf16.msra.mxu0 %v561
    %808 = vmatpush.bf16.msra.mxu0 %v557
    %809 = vmatpush.bf16.msra.mxu0 %v553
    %810 = vmatpush.bf16.msra.mxu0 %v549
    %811 = vmatpush.bf16.msra.mxu0 %v545
    %812 = vmatpush.bf16.msra.mxu0 %v541
    %813 = vmatpush.bf16.msra.mxu0 %v537
    %814 = vmatpush.bf16.msra.mxu0 %v533
    %815 = vmatmul.bf16.gmra.mxu0 %v237
    %v816 = vpop.f32.mrf.mxu0
    %v817 = vadd.f32 %v221, %v816
    %v818 = vpop.f32.mrf.mxu0
    %v819 = vadd.f32 %v221, %v818
    %820 = vdwg.mxu0
    %821 = vmatpush.bf16.msra.mxu0 %v593
    %822 = vmatpush.bf16.msra.mxu0 %v589
    %823 = vmatpush.bf16.msra.mxu0 %v585
    %824 = vmatpush.bf16.msra.mxu0 %v581
    %825 = vmatpush.bf16.msra.mxu0 %v577
    %826 = vmatpush.bf16.msra.mxu0 %v573
    %827 = vmatpush.bf16.msra.mxu0 %v569
    %828 = vmatpush.bf16.msra.mxu0 %v565
    %829 = vmatmul.bf16.gmra.mxu0 %v238
    %v830 = vpop.f32.mrf.mxu0
    %v831 = vadd.f32 %v817, %v830
    %v832 = vpop.f32.mrf.mxu0
    %v833 = vadd.f32 %v819, %v832
    %834 = vdwg.mxu0
    %835 = vmatpush.bf16.msra.mxu0 %v625
    %836 = vmatpush.bf16.msra.mxu0 %v621
    %837 = vmatpush.bf16.msra.mxu0 %v617
    %838 = vmatpush.bf16.msra.mxu0 %v613
    %839 = vmatpush.bf16.msra.mxu0 %v609
    %840 = vmatpush.bf16.msra.mxu0 %v605
    %841 = vmatpush.bf16.msra.mxu0 %v601
    %842 = vmatpush.bf16.msra.mxu0 %v597
    %843 = vmatmul.bf16.gmra.mxu0 %v239
    %v844 = vpop.f32.mrf.mxu0
    %v845 = vadd.f32 %v831, %v844
    %v846 = vpop.f32.mrf.mxu0
    %v847 = vadd.f32 %v833, %v846
    %848 = vdwg.mxu0
    %849 = vmatpush.bf16.msra.mxu0 %v562
    %850 = vmatpush.bf16.msra.mxu0 %v558
    %851 = vmatpush.bf16.msra.mxu0 %v554
    %852 = vmatpush.bf16.msra.mxu0 %v550
    %853 = vmatpush.bf16.msra.mxu0 %v546
    %854 = vmatpush.bf16.msra.mxu0 %v542
    %855 = vmatpush.bf16.msra.mxu0 %v538
    %856 = vmatpush.bf16.msra.mxu0 %v534
    %857 = vmatmul.bf16.gmra.mxu0 %v237
    %v858 = vpop.f32.mrf.mxu0
    %v859 = vadd.f32 %v222, %v858
    %v860 = vpop.f32.mrf.mxu0
    %v861 = vadd.f32 %v222, %v860
    %862 = vdwg.mxu0
    %863 = vmatpush.bf16.msra.mxu0 %v594
    %864 = vmatpush.bf16.msra.mxu0 %v590
    %865 = vmatpush.bf16.msra.mxu0 %v586
    %866 = vmatpush.bf16.msra.mxu0 %v582
    %867 = vmatpush.bf16.msra.mxu0 %v578
    %868 = vmatpush.bf16.msra.mxu0 %v574
    %869 = vmatpush.bf16.msra.mxu0 %v570
    %870 = vmatpush.bf16.msra.mxu0 %v566
    %871 = vmatmul.bf16.gmra.mxu0 %v238
    %v872 = vpop.f32.mrf.mxu0
    %v873 = vadd.f32 %v859, %v872
    %v874 = vpop.f32.mrf.mxu0
    %v875 = vadd.f32 %v861, %v874
    %876 = vdwg.mxu0
    %877 = vmatpush.bf16.msra.mxu0 %v626
    %878 = vmatpush.bf16.msra.mxu0 %v622
    %879 = vmatpush.bf16.msra.mxu0 %v618
    %880 = vmatpush.bf16.msra.mxu0 %v614
    %881 = vmatpush.bf16.msra.mxu0 %v610
    %882 = vmatpush.bf16.msra.mxu0 %v606
    %883 = vmatpush.bf16.msra.mxu0 %v602
    %884 = vmatpush.bf16.msra.mxu0 %v598
    %885 = vmatmul.bf16.gmra.mxu0 %v239
    %v886 = vpop.f32.mrf.mxu0
    %v887 = vadd.f32 %v873, %v886
    %v888 = vpop.f32.mrf.mxu0
    %v889 = vadd.f32 %v875, %v888
    %890 = vdwg.mxu0
    %v891 = vmax.f32 %v761, 0.0
    %v892 = vmax.f32 %v803, 0.0
    %v893 = vmax.f32 %v845, 0.0
    %v894 = vmax.f32 %v887, 0.0
    %v895 = vmax.f32 %v763, 0.0
    %v896 = vmax.f32 %v805, 0.0
    %v897 = vmax.f32 %v847, 0.0
    %v898 = vmax.f32 %v889, 0.0
    %v899 = vpack.c.bf16 %v895, %v891
    %v900 = vpack.c.bf16 %v896, %v892
    %v901 = vpack.c.bf16 %v897, %v893
    %v902 = vpack.c.bf16 %v898, %v894
    %v903 = vld [vmem:[#allocation8] sm:$0xff]
    %v904 = vld [vmem:[#allocation8 + $0x8] sm:$0xff]
    %v905 = vld [vmem:[#allocation8 + $0x10] sm:$0xff]
    %v906 = vld [vmem:[#allocation8 + $0x18] sm:$0xff]
    %v907 = vld [vmem:[#allocation8 + $0x20] sm:$0xff]
    %v908 = vld [vmem:[#allocation8 + $0x28] sm:$0xff]
    %v909 = vld [vmem:[#allocation8 + $0x30] sm:$0xff]
    %v910 = vld [vmem:[#allocation8 + $0x38] sm:$0xff]
    %v911 = vld [vmem:[#allocation8 + $0x40] sm:$0xff]
    %v912 = vld [vmem:[#allocation8 + $0x48] sm:$0xff]
    %v913 = vld [vmem:[#allocation8 + $0x50] sm:$0xff]
    %v914 = vld [vmem:[#allocation8 + $0x58] sm:$0xff]
    %v915 = vld [vmem:[#allocation8 + $0x60] sm:$0xff]
    %v916 = vld [vmem:[#allocation8 + $0x68] sm:$0xff]
    %v917 = vld [vmem:[#allocation8 + $0x70] sm:$0xff]
    %v918 = vld [vmem:[#allocation8 + $0x78] sm:$0xff]
    %v919 = vld [vmem:[#allocation8 + $0x80] sm:$0xff]
    %v920 = vld [vmem:[#allocation8 + $0x88] sm:$0xff]
    %v921 = vld [vmem:[#allocation8 + $0x90] sm:$0xff]
    %v922 = vld [vmem:[#allocation8 + $0x98] sm:$0xff]
    %v923 = vld [vmem:[#allocation8 + $0xa0] sm:$0xff]
    %v924 = vld [vmem:[#allocation8 + $0xa8] sm:$0xff]
    %v925 = vld [vmem:[#allocation8 + $0xb0] sm:$0xff]
    %v926 = vld [vmem:[#allocation8 + $0xb8] sm:$0xff]
    %v927 = vld [vmem:[#allocation8 + $0xc0] sm:$0xff]
    %v928 = vld [vmem:[#allocation8 + $0xc8] sm:$0xff]
    %v929 = vld [vmem:[#allocation8 + $0xd0] sm:$0xff]
    %v930 = vld [vmem:[#allocation8 + $0xd8] sm:$0xff]
    %v931 = vld [vmem:[#allocation8 + $0xe0] sm:$0xff]
    %v932 = vld [vmem:[#allocation8 + $0xe8] sm:$0xff]
    %v933 = vld [vmem:[#allocation8 + $0xf0] sm:$0xff]
    %v934 = vld [vmem:[#allocation8 + $0xf8] sm:$0xff]
    %v935 = vld [vmem:[#allocation8 + $0x100] sm:$0xff]
    %v936 = vld [vmem:[#allocation8 + $0x108] sm:$0xff]
    %v937 = vld [vmem:[#allocation8 + $0x110] sm:$0xff]
    %v938 = vld [vmem:[#allocation8 + $0x118] sm:$0xff]
    %v939 = vld [vmem:[#allocation8 + $0x120] sm:$0xff]
    %v940 = vld [vmem:[#allocation8 + $0x128] sm:$0xff]
    %v941 = vld [vmem:[#allocation8 + $0x130] sm:$0xff]
    %v942 = vld [vmem:[#allocation8 + $0x138] sm:$0xff]
    %v943 = vld [vmem:[#allocation8 + $0x140] sm:$0xff]
    %v944 = vld [vmem:[#allocation8 + $0x148] sm:$0xff]
    %v945 = vld [vmem:[#allocation8 + $0x150] sm:$0xff]
    %v946 = vld [vmem:[#allocation8 + $0x158] sm:$0xff]
    %v947 = vld [vmem:[#allocation8 + $0x160] sm:$0xff]
    %v948 = vld [vmem:[#allocation8 + $0x168] sm:$0xff]
    %v949 = vld [vmem:[#allocation8 + $0x170] sm:$0xff]
    %v950 = vld [vmem:[#allocation8 + $0x178] sm:$0xff]
    %v951 = vld [vmem:[#allocation8 + $0x180] sm:$0xff]
    %v952 = vld [vmem:[#allocation8 + $0x188] sm:$0xff]
    %v953 = vld [vmem:[#allocation8 + $0x190] sm:$0xff]
    %v954 = vld [vmem:[#allocation8 + $0x198] sm:$0xff]
    %v955 = vld [vmem:[#allocation8 + $0x1a0] sm:$0xff]
    %v956 = vld [vmem:[#allocation8 + $0x1a8] sm:$0xff]
    %v957 = vld [vmem:[#allocation8 + $0x1b0] sm:$0xff]
    %v958 = vld [vmem:[#allocation8 + $0x1b8] sm:$0xff]
    %v959 = vld [vmem:[#allocation8 + $0x1c0] sm:$0xff]
    %v960 = vld [vmem:[#allocation8 + $0x1c8] sm:$0xff]
    %v961 = vld [vmem:[#allocation8 + $0x1d0] sm:$0xff]
    %v962 = vld [vmem:[#allocation8 + $0x1d8] sm:$0xff]
    %v963 = vld [vmem:[#allocation8 + $0x1e0] sm:$0xff]
    %v964 = vld [vmem:[#allocation8 + $0x1e8] sm:$0xff]
    %v965 = vld [vmem:[#allocation8 + $0x1f0] sm:$0xff]
    %v966 = vld [vmem:[#allocation8 + $0x1f8] sm:$0xff]
    %v967 = vld [vmem:[#allocation8 + $0x200] sm:$0xff]
    %v968 = vld [vmem:[#allocation8 + $0x208] sm:$0xff]
    %v969 = vld [vmem:[#allocation8 + $0x210] sm:$0xff]
    %v970 = vld [vmem:[#allocation8 + $0x218] sm:$0xff]
    %v971 = vld [vmem:[#allocation8 + $0x220] sm:$0xff]
    %v972 = vld [vmem:[#allocation8 + $0x228] sm:$0xff]
    %v973 = vld [vmem:[#allocation8 + $0x230] sm:$0xff]
    %v974 = vld [vmem:[#allocation8 + $0x238] sm:$0xff]
    %v975 = vld [vmem:[#allocation8 + $0x240] sm:$0xff]
    %v976 = vld [vmem:[#allocation8 + $0x248] sm:$0xff]
    %v977 = vld [vmem:[#allocation8 + $0x250] sm:$0xff]
    %v978 = vld [vmem:[#allocation8 + $0x258] sm:$0xff]
    %v979 = vld [vmem:[#allocation8 + $0x260] sm:$0xff]
    %v980 = vld [vmem:[#allocation8 + $0x268] sm:$0xff]
    %v981 = vld [vmem:[#allocation8 + $0x270] sm:$0xff]
    %v982 = vld [vmem:[#allocation8 + $0x278] sm:$0xff]
    %v983 = vld [vmem:[#allocation8 + $0x280] sm:$0xff]
    %v984 = vld [vmem:[#allocation8 + $0x288] sm:$0xff]
    %v985 = vld [vmem:[#allocation8 + $0x290] sm:$0xff]
    %v986 = vld [vmem:[#allocation8 + $0x298] sm:$0xff]
    %v987 = vld [vmem:[#allocation8 + $0x2a0] sm:$0xff]
    %v988 = vld [vmem:[#allocation8 + $0x2a8] sm:$0xff]
    %v989 = vld [vmem:[#allocation8 + $0x2b0] sm:$0xff]
    %v990 = vld [vmem:[#allocation8 + $0x2b8] sm:$0xff]
    %v991 = vld [vmem:[#allocation8 + $0x2c0] sm:$0xff]
    %v992 = vld [vmem:[#allocation8 + $0x2c8] sm:$0xff]
    %v993 = vld [vmem:[#allocation8 + $0x2d0] sm:$0xff]
    %v994 = vld [vmem:[#allocation8 + $0x2d8] sm:$0xff]
    %v995 = vld [vmem:[#allocation8 + $0x2e0] sm:$0xff]
    %v996 = vld [vmem:[#allocation8 + $0x2e8] sm:$0xff]
    %v997 = vld [vmem:[#allocation8 + $0x2f0] sm:$0xff]
    %v998 = vld [vmem:[#allocation8 + $0x2f8] sm:$0xff]
    %v999 = vld [vmem:[#allocation8 + $0x300] sm:$0xff]
    %v1000 = vld [vmem:[#allocation8 + $0x308] sm:$0xff]
    %v1001 = vld [vmem:[#allocation8 + $0x310] sm:$0xff]
    %v1002 = vld [vmem:[#allocation8 + $0x318] sm:$0xff]
    %v1003 = vld [vmem:[#allocation8 + $0x320] sm:$0xff]
    %v1004 = vld [vmem:[#allocation8 + $0x328] sm:$0xff]
    %v1005 = vld [vmem:[#allocation8 + $0x330] sm:$0xff]
    %v1006 = vld [vmem:[#allocation8 + $0x338] sm:$0xff]
    %v1007 = vld [vmem:[#allocation8 + $0x340] sm:$0xff]
    %v1008 = vld [vmem:[#allocation8 + $0x348] sm:$0xff]
    %v1009 = vld [vmem:[#allocation8 + $0x350] sm:$0xff]
    %v1010 = vld [vmem:[#allocation8 + $0x358] sm:$0xff]
    %v1011 = vld [vmem:[#allocation8 + $0x360] sm:$0xff]
    %v1012 = vld [vmem:[#allocation8 + $0x368] sm:$0xff]
    %v1013 = vld [vmem:[#allocation8 + $0x370] sm:$0xff]
    %v1014 = vld [vmem:[#allocation8 + $0x378] sm:$0xff]
    %v1015 = vld [vmem:[#allocation8 + $0x380] sm:$0xff]
    %v1016 = vld [vmem:[#allocation8 + $0x388] sm:$0xff]
    %v1017 = vld [vmem:[#allocation8 + $0x390] sm:$0xff]
    %v1018 = vld [vmem:[#allocation8 + $0x398] sm:$0xff]
    %v1019 = vld [vmem:[#allocation8 + $0x3a0] sm:$0xff]
    %v1020 = vld [vmem:[#allocation8 + $0x3a8] sm:$0xff]
    %v1021 = vld [vmem:[#allocation8 + $0x3b0] sm:$0xff]
    %v1022 = vld [vmem:[#allocation8 + $0x3b8] sm:$0xff]
    %v1023 = vld [vmem:[#allocation8 + $0x3c0] sm:$0xff]
    %v1024 = vld [vmem:[#allocation8 + $0x3c8] sm:$0xff]
    %v1025 = vld [vmem:[#allocation8 + $0x3d0] sm:$0xff]
    %v1026 = vld [vmem:[#allocation8 + $0x3d8] sm:$0xff]
    %v1027 = vld [vmem:[#allocation8 + $0x3e0] sm:$0xff]
    %v1028 = vld [vmem:[#allocation8 + $0x3e8] sm:$0xff]
    %v1029 = vld [vmem:[#allocation8 + $0x3f0] sm:$0xff]
    %v1030 = vld [vmem:[#allocation8 + $0x3f8] sm:$0xff]
    %v1031 = vld [vmem:[#allocation10] sm:$0xf]
    %v1033 = vperm.slane %v1031, 0
    %v1034 = vperm.slane %v1031, 1
    %v1035 = vperm.slane %v1031, 2
    %v1036 = vperm.slane %v1031, 3
    %v1169 = vunpack.c.l.b16 %v903
    %v1170 = vunpack.c.h.b16 %v903
    %v1171 = vunpack.c.l.b16 %v904
    %v1172 = vunpack.c.h.b16 %v904
    %v1173 = vunpack.c.l.b16 %v905
    %v1174 = vunpack.c.h.b16 %v905
    %v1175 = vunpack.c.l.b16 %v906
    %v1176 = vunpack.c.h.b16 %v906
    %v1177 = vunpack.c.l.b16 %v907
    %v1178 = vunpack.c.h.b16 %v907
    %v1179 = vunpack.c.l.b16 %v908
    %v1180 = vunpack.c.h.b16 %v908
    %v1181 = vunpack.c.l.b16 %v909
    %v1182 = vunpack.c.h.b16 %v909
    %v1183 = vunpack.c.l.b16 %v910
    %v1184 = vunpack.c.h.b16 %v910
    %v1185 = vunpack.c.l.b16 %v911
    %v1186 = vunpack.c.h.b16 %v911
    %v1187 = vunpack.c.l.b16 %v912
    %v1188 = vunpack.c.h.b16 %v912
    %v1189 = vunpack.c.l.b16 %v913
    %v1190 = vunpack.c.h.b16 %v913
    %v1191 = vunpack.c.l.b16 %v914
    %v1192 = vunpack.c.h.b16 %v914
    %v1193 = vunpack.c.l.b16 %v915
    %v1194 = vunpack.c.h.b16 %v915
    %v1195 = vunpack.c.l.b16 %v916
    %v1196 = vunpack.c.h.b16 %v916
    %v1197 = vunpack.c.l.b16 %v917
    %v1198 = vunpack.c.h.b16 %v917
    %v1199 = vunpack.c.l.b16 %v918
    %v1200 = vunpack.c.h.b16 %v918
    %v1201 = vunpack.c.l.b16 %v919
    %v1202 = vunpack.c.h.b16 %v919
    %v1203 = vunpack.c.l.b16 %v920
    %v1204 = vunpack.c.h.b16 %v920
    %v1205 = vunpack.c.l.b16 %v921
    %v1206 = vunpack.c.h.b16 %v921
    %v1207 = vunpack.c.l.b16 %v922
    %v1208 = vunpack.c.h.b16 %v922
    %v1209 = vunpack.c.l.b16 %v923
    %v1210 = vunpack.c.h.b16 %v923
    %v1211 = vunpack.c.l.b16 %v924
    %v1212 = vunpack.c.h.b16 %v924
    %v1213 = vunpack.c.l.b16 %v925
    %v1214 = vunpack.c.h.b16 %v925
    %v1215 = vunpack.c.l.b16 %v926
    %v1216 = vunpack.c.h.b16 %v926
    %v1217 = vunpack.c.l.b16 %v927
    %v1218 = vunpack.c.h.b16 %v927
    %v1219 = vunpack.c.l.b16 %v928
    %v1220 = vunpack.c.h.b16 %v928
    %v1221 = vunpack.c.l.b16 %v929
    %v1222 = vunpack.c.h.b16 %v929
    %v1223 = vunpack.c.l.b16 %v930
    %v1224 = vunpack.c.h.b16 %v930
    %v1225 = vunpack.c.l.b16 %v931
    %v1226 = vunpack.c.h.b16 %v931
    %v1227 = vunpack.c.l.b16 %v932
    %v1228 = vunpack.c.h.b16 %v932
    %v1229 = vunpack.c.l.b16 %v933
    %v1230 = vunpack.c.h.b16 %v933
    %v1231 = vunpack.c.l.b16 %v934
    %v1232 = vunpack.c.h.b16 %v934
    %v1233 = vunpack.c.l.b16 %v935
    %v1234 = vunpack.c.h.b16 %v935
    %v1235 = vunpack.c.l.b16 %v936
    %v1236 = vunpack.c.h.b16 %v936
    %v1237 = vunpack.c.l.b16 %v937
    %v1238 = vunpack.c.h.b16 %v937
    %v1239 = vunpack.c.l.b16 %v938
    %v1240 = vunpack.c.h.b16 %v938
    %v1241 = vunpack.c.l.b16 %v939
    %v1242 = vunpack.c.h.b16 %v939
    %v1243 = vunpack.c.l.b16 %v940
    %v1244 = vunpack.c.h.b16 %v940
    %v1245 = vunpack.c.l.b16 %v941
    %v1246 = vunpack.c.h.b16 %v941
    %v1247 = vunpack.c.l.b16 %v942
    %v1248 = vunpack.c.h.b16 %v942
    %v1249 = vunpack.c.l.b16 %v943
    %v1250 = vunpack.c.h.b16 %v943
    %v1251 = vunpack.c.l.b16 %v944
    %v1252 = vunpack.c.h.b16 %v944
    %v1253 = vunpack.c.l.b16 %v945
    %v1254 = vunpack.c.h.b16 %v945
    %v1255 = vunpack.c.l.b16 %v946
    %v1256 = vunpack.c.h.b16 %v946
    %v1257 = vunpack.c.l.b16 %v947
    %v1258 = vunpack.c.h.b16 %v947
    %v1259 = vunpack.c.l.b16 %v948
    %v1260 = vunpack.c.h.b16 %v948
    %v1261 = vunpack.c.l.b16 %v949
    %v1262 = vunpack.c.h.b16 %v949
    %v1263 = vunpack.c.l.b16 %v950
    %v1264 = vunpack.c.h.b16 %v950
    %v1265 = vunpack.c.l.b16 %v951
    %v1266 = vunpack.c.h.b16 %v951
    %v1267 = vunpack.c.l.b16 %v952
    %v1268 = vunpack.c.h.b16 %v952
    %v1269 = vunpack.c.l.b16 %v953
    %v1270 = vunpack.c.h.b16 %v953
    %v1271 = vunpack.c.l.b16 %v954
    %v1272 = vunpack.c.h.b16 %v954
    %v1273 = vunpack.c.l.b16 %v955
    %v1274 = vunpack.c.h.b16 %v955
    %v1275 = vunpack.c.l.b16 %v956
    %v1276 = vunpack.c.h.b16 %v956
    %v1277 = vunpack.c.l.b16 %v957
    %v1278 = vunpack.c.h.b16 %v957
    %v1279 = vunpack.c.l.b16 %v958
    %v1280 = vunpack.c.h.b16 %v958
    %v1281 = vunpack.c.l.b16 %v959
    %v1282 = vunpack.c.h.b16 %v959
    %v1283 = vunpack.c.l.b16 %v960
    %v1284 = vunpack.c.h.b16 %v960
    %v1285 = vunpack.c.l.b16 %v961
    %v1286 = vunpack.c.h.b16 %v961
    %v1287 = vunpack.c.l.b16 %v962
    %v1288 = vunpack.c.h.b16 %v962
    %v1289 = vunpack.c.l.b16 %v963
    %v1290 = vunpack.c.h.b16 %v963
    %v1291 = vunpack.c.l.b16 %v964
    %v1292 = vunpack.c.h.b16 %v964
    %v1293 = vunpack.c.l.b16 %v965
    %v1294 = vunpack.c.h.b16 %v965
    %v1295 = vunpack.c.l.b16 %v966
    %v1296 = vunpack.c.h.b16 %v966
    %v1297 = vunpack.c.l.b16 %v967
    %v1298 = vunpack.c.h.b16 %v967
    %v1299 = vunpack.c.l.b16 %v968
    %v1300 = vunpack.c.h.b16 %v968
    %v1301 = vunpack.c.l.b16 %v969
    %v1302 = vunpack.c.h.b16 %v969
    %v1303 = vunpack.c.l.b16 %v970
    %v1304 = vunpack.c.h.b16 %v970
    %v1305 = vunpack.c.l.b16 %v971
    %v1306 = vunpack.c.h.b16 %v971
    %v1307 = vunpack.c.l.b16 %v972
    %v1308 = vunpack.c.h.b16 %v972
    %v1309 = vunpack.c.l.b16 %v973
    %v1310 = vunpack.c.h.b16 %v973
    %v1311 = vunpack.c.l.b16 %v974
    %v1312 = vunpack.c.h.b16 %v974
    %v1313 = vunpack.c.l.b16 %v975
    %v1314 = vunpack.c.h.b16 %v975
    %v1315 = vunpack.c.l.b16 %v976
    %v1316 = vunpack.c.h.b16 %v976
    %v1317 = vunpack.c.l.b16 %v977
    %v1318 = vunpack.c.h.b16 %v977
    %v1319 = vunpack.c.l.b16 %v978
    %v1320 = vunpack.c.h.b16 %v978
    %v1321 = vunpack.c.l.b16 %v979
    %v1322 = vunpack.c.h.b16 %v979
    %v1323 = vunpack.c.l.b16 %v980
    %v1324 = vunpack.c.h.b16 %v980
    %v1325 = vunpack.c.l.b16 %v981
    %v1326 = vunpack.c.h.b16 %v981
    %v1327 = vunpack.c.l.b16 %v982
    %v1328 = vunpack.c.h.b16 %v982
    %v1329 = vunpack.c.l.b16 %v983
    %v1330 = vunpack.c.h.b16 %v983
    %v1331 = vunpack.c.l.b16 %v984
    %v1332 = vunpack.c.h.b16 %v984
    %v1333 = vunpack.c.l.b16 %v985
    %v1334 = vunpack.c.h.b16 %v985
    %v1335 = vunpack.c.l.b16 %v986
    %v1336 = vunpack.c.h.b16 %v986
    %v1337 = vunpack.c.l.b16 %v987
    %v1338 = vunpack.c.h.b16 %v987
    %v1339 = vunpack.c.l.b16 %v988
    %v1340 = vunpack.c.h.b16 %v988
    %v1341 = vunpack.c.l.b16 %v989
    %v1342 = vunpack.c.h.b16 %v989
    %v1343 = vunpack.c.l.b16 %v990
    %v1344 = vunpack.c.h.b16 %v990
    %v1345 = vunpack.c.l.b16 %v991
    %v1346 = vunpack.c.h.b16 %v991
    %v1347 = vunpack.c.l.b16 %v992
    %v1348 = vunpack.c.h.b16 %v992
    %v1349 = vunpack.c.l.b16 %v993
    %v1350 = vunpack.c.h.b16 %v993
    %v1351 = vunpack.c.l.b16 %v994
    %v1352 = vunpack.c.h.b16 %v994
    %v1353 = vunpack.c.l.b16 %v995
    %v1354 = vunpack.c.h.b16 %v995
    %v1355 = vunpack.c.l.b16 %v996
    %v1356 = vunpack.c.h.b16 %v996
    %v1357 = vunpack.c.l.b16 %v997
    %v1358 = vunpack.c.h.b16 %v997
    %v1359 = vunpack.c.l.b16 %v998
    %v1360 = vunpack.c.h.b16 %v998
    %v1361 = vunpack.c.l.b16 %v999
    %v1362 = vunpack.c.h.b16 %v999
    %v1363 = vunpack.c.l.b16 %v1000
    %v1364 = vunpack.c.h.b16 %v1000
    %v1365 = vunpack.c.l.b16 %v1001
    %v1366 = vunpack.c.h.b16 %v1001
    %v1367 = vunpack.c.l.b16 %v1002
    %v1368 = vunpack.c.h.b16 %v1002
    %v1369 = vunpack.c.l.b16 %v1003
    %v1370 = vunpack.c.h.b16 %v1003
    %v1371 = vunpack.c.l.b16 %v1004
    %v1372 = vunpack.c.h.b16 %v1004
    %v1373 = vunpack.c.l.b16 %v1005
    %v1374 = vunpack.c.h.b16 %v1005
    %v1375 = vunpack.c.l.b16 %v1006
    %v1376 = vunpack.c.h.b16 %v1006
    %v1377 = vunpack.c.l.b16 %v1007
    %v1378 = vunpack.c.h.b16 %v1007
    %v1379 = vunpack.c.l.b16 %v1008
    %v1380 = vunpack.c.h.b16 %v1008
    %v1381 = vunpack.c.l.b16 %v1009
    %v1382 = vunpack.c.h.b16 %v1009
    %v1383 = vunpack.c.l.b16 %v1010
    %v1384 = vunpack.c.h.b16 %v1010
    %v1385 = vunpack.c.l.b16 %v1011
    %v1386 = vunpack.c.h.b16 %v1011
    %v1387 = vunpack.c.l.b16 %v1012
    %v1388 = vunpack.c.h.b16 %v1012
    %v1389 = vunpack.c.l.b16 %v1013
    %v1390 = vunpack.c.h.b16 %v1013
    %v1391 = vunpack.c.l.b16 %v1014
    %v1392 = vunpack.c.h.b16 %v1014
    %v1393 = vunpack.c.l.b16 %v1015
    %v1394 = vunpack.c.h.b16 %v1015
    %v1395 = vunpack.c.l.b16 %v1016
    %v1396 = vunpack.c.h.b16 %v1016
    %v1397 = vunpack.c.l.b16 %v1017
    %v1398 = vunpack.c.h.b16 %v1017
    %v1399 = vunpack.c.l.b16 %v1018
    %v1400 = vunpack.c.h.b16 %v1018
    %v1401 = vunpack.c.l.b16 %v1019
    %v1402 = vunpack.c.h.b16 %v1019
    %v1403 = vunpack.c.l.b16 %v1020
    %v1404 = vunpack.c.h.b16 %v1020
    %v1405 = vunpack.c.l.b16 %v1021
    %v1406 = vunpack.c.h.b16 %v1021
    %v1407 = vunpack.c.l.b16 %v1022
    %v1408 = vunpack.c.h.b16 %v1022
    %v1409 = vunpack.c.l.b16 %v1023
    %v1410 = vunpack.c.h.b16 %v1023
    %v1411 = vunpack.c.l.b16 %v1024
    %v1412 = vunpack.c.h.b16 %v1024
    %v1413 = vunpack.c.l.b16 %v1025
    %v1414 = vunpack.c.h.b16 %v1025
    %v1415 = vunpack.c.l.b16 %v1026
    %v1416 = vunpack.c.h.b16 %v1026
    %v1417 = vunpack.c.l.b16 %v1027
    %v1418 = vunpack.c.h.b16 %v1027
    %v1419 = vunpack.c.l.b16 %v1028
    %v1420 = vunpack.c.h.b16 %v1028
    %v1421 = vunpack.c.l.b16 %v1029
    %v1422 = vunpack.c.h.b16 %v1029
    %v1423 = vunpack.c.l.b16 %v1030
    %v1424 = vunpack.c.h.b16 %v1030
    %v1425 = vpack.c.b16 %v1173, %v1169
    %v1426 = vpack.c.b16 %v1174, %v1170
    %v1427 = vpack.c.b16 %v1175, %v1171
    %v1428 = vpack.c.b16 %v1176, %v1172
    %v1429 = vpack.c.b16 %v1181, %v1177
    %v1430 = vpack.c.b16 %v1182, %v1178
    %v1431 = vpack.c.b16 %v1183, %v1179
    %v1432 = vpack.c.b16 %v1184, %v1180
    %v1433 = vpack.c.b16 %v1189, %v1185
    %v1434 = vpack.c.b16 %v1190, %v1186
    %v1435 = vpack.c.b16 %v1191, %v1187
    %v1436 = vpack.c.b16 %v1192, %v1188
    %v1437 = vpack.c.b16 %v1197, %v1193
    %v1438 = vpack.c.b16 %v1198, %v1194
    %v1439 = vpack.c.b16 %v1199, %v1195
    %v1440 = vpack.c.b16 %v1200, %v1196
    %v1441 = vpack.c.b16 %v1205, %v1201
    %v1442 = vpack.c.b16 %v1206, %v1202
    %v1443 = vpack.c.b16 %v1207, %v1203
    %v1444 = vpack.c.b16 %v1208, %v1204
    %v1445 = vpack.c.b16 %v1213, %v1209
    %v1446 = vpack.c.b16 %v1214, %v1210
    %v1447 = vpack.c.b16 %v1215, %v1211
    %v1448 = vpack.c.b16 %v1216, %v1212
    %v1449 = vpack.c.b16 %v1221, %v1217
    %v1450 = vpack.c.b16 %v1222, %v1218
    %v1451 = vpack.c.b16 %v1223, %v1219
    %v1452 = vpack.c.b16 %v1224, %v1220
    %v1453 = vpack.c.b16 %v1229, %v1225
    %v1454 = vpack.c.b16 %v1230, %v1226
    %v1455 = vpack.c.b16 %v1231, %v1227
    %v1456 = vpack.c.b16 %v1232, %v1228
    %v1457 = vpack.c.b16 %v1237, %v1233
    %v1458 = vpack.c.b16 %v1238, %v1234
    %v1459 = vpack.c.b16 %v1239, %v1235
    %v1460 = vpack.c.b16 %v1240, %v1236
    %v1461 = vpack.c.b16 %v1245, %v1241
    %v1462 = vpack.c.b16 %v1246, %v1242
    %v1463 = vpack.c.b16 %v1247, %v1243
    %v1464 = vpack.c.b16 %v1248, %v1244
    %v1465 = vpack.c.b16 %v1253, %v1249
    %v1466 = vpack.c.b16 %v1254, %v1250
    %v1467 = vpack.c.b16 %v1255, %v1251
    %v1468 = vpack.c.b16 %v1256, %v1252
    %v1469 = vpack.c.b16 %v1261, %v1257
    %v1470 = vpack.c.b16 %v1262, %v1258
    %v1471 = vpack.c.b16 %v1263, %v1259
    %v1472 = vpack.c.b16 %v1264, %v1260
    %v1473 = vpack.c.b16 %v1269, %v1265
    %v1474 = vpack.c.b16 %v1270, %v1266
    %v1475 = vpack.c.b16 %v1271, %v1267
    %v1476 = vpack.c.b16 %v1272, %v1268
    %v1477 = vpack.c.b16 %v1277, %v1273
    %v1478 = vpack.c.b16 %v1278, %v1274
    %v1479 = vpack.c.b16 %v1279, %v1275
    %v1480 = vpack.c.b16 %v1280, %v1276
    %v1481 = vpack.c.b16 %v1285, %v1281
    %v1482 = vpack.c.b16 %v1286, %v1282
    %v1483 = vpack.c.b16 %v1287, %v1283
    %v1484 = vpack.c.b16 %v1288, %v1284
    %v1485 = vpack.c.b16 %v1293, %v1289
    %v1486 = vpack.c.b16 %v1294, %v1290
    %v1487 = vpack.c.b16 %v1295, %v1291
    %v1488 = vpack.c.b16 %v1296, %v1292
    %v1489 = vpack.c.b16 %v1301, %v1297
    %v1490 = vpack.c.b16 %v1302, %v1298
    %v1491 = vpack.c.b16 %v1303, %v1299
    %v1492 = vpack.c.b16 %v1304, %v1300
    %v1493 = vpack.c.b16 %v1309, %v1305
    %v1494 = vpack.c.b16 %v1310, %v1306
    %v1495 = vpack.c.b16 %v1311, %v1307
    %v1496 = vpack.c.b16 %v1312, %v1308
    %v1497 = vpack.c.b16 %v1317, %v1313
    %v1498 = vpack.c.b16 %v1318, %v1314
    %v1499 = vpack.c.b16 %v1319, %v1315
    %v1500 = vpack.c.b16 %v1320, %v1316
    %v1501 = vpack.c.b16 %v1325, %v1321
    %v1502 = vpack.c.b16 %v1326, %v1322
    %v1503 = vpack.c.b16 %v1327, %v1323
    %v1504 = vpack.c.b16 %v1328, %v1324
    %v1505 = vpack.c.b16 %v1333, %v1329
    %v1506 = vpack.c.b16 %v1334, %v1330
    %v1507 = vpack.c.b16 %v1335, %v1331
    %v1508 = vpack.c.b16 %v1336, %v1332
    %v1509 = vpack.c.b16 %v1341, %v1337
    %v1510 = vpack.c.b16 %v1342, %v1338
    %v1511 = vpack.c.b16 %v1343, %v1339
    %v1512 = vpack.c.b16 %v1344, %v1340
    %v1513 = vpack.c.b16 %v1349, %v1345
    %v1514 = vpack.c.b16 %v1350, %v1346
    %v1515 = vpack.c.b16 %v1351, %v1347
    %v1516 = vpack.c.b16 %v1352, %v1348
    %v1517 = vpack.c.b16 %v1357, %v1353
    %v1518 = vpack.c.b16 %v1358, %v1354
    %v1519 = vpack.c.b16 %v1359, %v1355
    %v1520 = vpack.c.b16 %v1360, %v1356
    %v1521 = vpack.c.b16 %v1365, %v1361
    %v1522 = vpack.c.b16 %v1366, %v1362
    %v1523 = vpack.c.b16 %v1367, %v1363
    %v1524 = vpack.c.b16 %v1368, %v1364
    %v1525 = vpack.c.b16 %v1373, %v1369
    %v1526 = vpack.c.b16 %v1374, %v1370
    %v1527 = vpack.c.b16 %v1375, %v1371
    %v1528 = vpack.c.b16 %v1376, %v1372
    %v1529 = vpack.c.b16 %v1381, %v1377
    %v1530 = vpack.c.b16 %v1382, %v1378
    %v1531 = vpack.c.b16 %v1383, %v1379
    %v1532 = vpack.c.b16 %v1384, %v1380
    %v1533 = vpack.c.b16 %v1389, %v1385
    %v1534 = vpack.c.b16 %v1390, %v1386
    %v1535 = vpack.c.b16 %v1391, %v1387
    %v1536 = vpack.c.b16 %v1392, %v1388
    %v1537 = vpack.c.b16 %v1397, %v1393
    %v1538 = vpack.c.b16 %v1398, %v1394
    %v1539 = vpack.c.b16 %v1399, %v1395
    %v1540 = vpack.c.b16 %v1400, %v1396
    %v1541 = vpack.c.b16 %v1405, %v1401
    %v1542 = vpack.c.b16 %v1406, %v1402
    %v1543 = vpack.c.b16 %v1407, %v1403
    %v1544 = vpack.c.b16 %v1408, %v1404
    %v1545 = vpack.c.b16 %v1413, %v1409
    %v1546 = vpack.c.b16 %v1414, %v1410
    %v1547 = vpack.c.b16 %v1415, %v1411
    %v1548 = vpack.c.b16 %v1416, %v1412
    %v1549 = vpack.c.b16 %v1421, %v1417
    %v1550 = vpack.c.b16 %v1422, %v1418
    %v1551 = vpack.c.b16 %v1423, %v1419
    %v1552 = vpack.c.b16 %v1424, %v1420
    %1681 = vmatpush.bf16.msra.mxu0 %v1453
    %1682 = vmatpush.bf16.msra.mxu0 %v1449
    %1683 = vmatpush.bf16.msra.mxu0 %v1445
    %1684 = vmatpush.bf16.msra.mxu0 %v1441
    %1685 = vmatpush.bf16.msra.mxu0 %v1437
    %1686 = vmatpush.bf16.msra.mxu0 %v1433
    %1687 = vmatpush.bf16.msra.mxu0 %v1429
    %1688 = vmatpush.bf16.msra.mxu0 %v1425
    %1689 = vmatmul.bf16.gmra.mxu0 %v899
    %v1690 = vpop.f32.mrf.mxu0
    %v1691 = vadd.f32 %v1033, %v1690
    %v1692 = vpop.f32.mrf.mxu0
    %v1693 = vadd.f32 %v1033, %v1692
    %1694 = vdwg.mxu0
    %1695 = vmatpush.bf16.msra.mxu0 %v1485
    %1696 = vmatpush.bf16.msra.mxu0 %v1481
    %1697 = vmatpush.bf16.msra.mxu0 %v1477
    %1698 = vmatpush.bf16.msra.mxu0 %v1473
    %1699 = vmatpush.bf16.msra.mxu0 %v1469
    %1700 = vmatpush.bf16.msra.mxu0 %v1465
    %1701 = vmatpush.bf16.msra.mxu0 %v1461
    %1702 = vmatpush.bf16.msra.mxu0 %v1457
    %1703 = vmatmul.bf16.gmra.mxu0 %v900
    %v1704 = vpop.f32.mrf.mxu0
    %v1705 = vadd.f32 %v1691, %v1704
    %v1706 = vpop.f32.mrf.mxu0
    %v1707 = vadd.f32 %v1693, %v1706
    %1708 = vdwg.mxu0
    %1709 = vmatpush.bf16.msra.mxu0 %v1517
    %1710 = vmatpush.bf16.msra.mxu0 %v1513
    %1711 = vmatpush.bf16.msra.mxu0 %v1509
    %1712 = vmatpush.bf16.msra.mxu0 %v1505
    %1713 = vmatpush.bf16.msra.mxu0 %v1501
    %1714 = vmatpush.bf16.msra.mxu0 %v1497
    %1715 = vmatpush.bf16.msra.mxu0 %v1493
    %1716 = vmatpush.bf16.msra.mxu0 %v1489
    %1717 = vmatmul.bf16.gmra.mxu0 %v901
    %v1718 = vpop.f32.mrf.mxu0
    %v1719 = vadd.f32 %v1705, %v1718
    %v1720 = vpop.f32.mrf.mxu0
    %v1721 = vadd.f32 %v1707, %v1720
    %1722 = vdwg.mxu0
    %1723 = vmatpush.bf16.msra.mxu0 %v1549
    %1724 = vmatpush.bf16.msra.mxu0 %v1545
    %1725 = vmatpush.bf16.msra.mxu0 %v1541
    %1726 = vmatpush.bf16.msra.mxu0 %v1537
    %1727 = vmatpush.bf16.msra.mxu0 %v1533
    %1728 = vmatpush.bf16.msra.mxu0 %v1529
    %1729 = vmatpush.bf16.msra.mxu0 %v1525
    %1730 = vmatpush.bf16.msra.mxu0 %v1521
    %1731 = vmatmul.bf16.gmra.mxu0 %v902
    %v1732 = vpop.f32.mrf.mxu0
    %v1733 = vadd.f32 %v1719, %v1732
    %v1734 = vpop.f32.mrf.mxu0
    %v1735 = vadd.f32 %v1721, %v1734
    %1736 = vdwg.mxu0
    %1737 = vmatpush.bf16.msra.mxu0 %v1454
    %1738 = vmatpush.bf16.msra.mxu0 %v1450
    %1739 = vmatpush.bf16.msra.mxu0 %v1446
    %1740 = vmatpush.bf16.msra.mxu0 %v1442
    %1741 = vmatpush.bf16.msra.mxu0 %v1438
    %1742 = vmatpush.bf16.msra.mxu0 %v1434
    %1743 = vmatpush.bf16.msra.mxu0 %v1430
    %1744 = vmatpush.bf16.msra.mxu0 %v1426
    %1745 = vmatmul.bf16.gmra.mxu0 %v899
    %v1746 = vpop.f32.mrf.mxu0
    %v1747 = vadd.f32 %v1034, %v1746
    %v1748 = vpop.f32.mrf.mxu0
    %v1749 = vadd.f32 %v1034, %v1748
    %1750 = vdwg.mxu0
    %1751 = vmatpush.bf16.msra.mxu0 %v1486
    %1752 = vmatpush.bf16.msra.mxu0 %v1482
    %1753 = vmatpush.bf16.msra.mxu0 %v1478
    %1754 = vmatpush.bf16.msra.mxu0 %v1474
    %1755 = vmatpush.bf16.msra.mxu0 %v1470
    %1756 = vmatpush.bf16.msra.mxu0 %v1466
    %1757 = vmatpush.bf16.msra.mxu0 %v1462
    %1758 = vmatpush.bf16.msra.mxu0 %v1458
    %1759 = vmatmul.bf16.gmra.mxu0 %v900
    %v1760 = vpop.f32.mrf.mxu0
    %v1761 = vadd.f32 %v1747, %v1760
    %v1762 = vpop.f32.mrf.mxu0
    %v1763 = vadd.f32 %v1749, %v1762
    %1764 = vdwg.mxu0
    %1765 = vmatpush.bf16.msra.mxu0 %v1518
    %1766 = vmatpush.bf16.msra.mxu0 %v1514
    %1767 = vmatpush.bf16.msra.mxu0 %v1510
    %1768 = vmatpush.bf16.msra.mxu0 %v1506
    %1769 = vmatpush.bf16.msra.mxu0 %v1502
    %1770 = vmatpush.bf16.msra.mxu0 %v1498
    %1771 = vmatpush.bf16.msra.mxu0 %v1494
    %1772 = vmatpush.bf16.msra.mxu0 %v1490
    %1773 = vmatmul.bf16.gmra.mxu0 %v901
    %v1774 = vpop.f32.mrf.mxu0
    %v1775 = vadd.f32 %v1761, %v1774
    %v1776 = vpop.f32.mrf.mxu0
    %v1777 = vadd.f32 %v1763, %v1776
    %1778 = vdwg.mxu0
    %1779 = vmatpush.bf16.msra.mxu0 %v1550
    %1780 = vmatpush.bf16.msra.mxu0 %v1546
    %1781 = vmatpush.bf16.msra.mxu0 %v1542
    %1782 = vmatpush.bf16.msra.mxu0 %v1538
    %1783 = vmatpush.bf16.msra.mxu0 %v1534
    %1784 = vmatpush.bf16.msra.mxu0 %v1530
    %1785 = vmatpush.bf16.msra.mxu0 %v1526
    %1786 = vmatpush.bf16.msra.mxu0 %v1522
    %1787 = vmatmul.bf16.gmra.mxu0 %v902
    %v1788 = vpop.f32.mrf.mxu0
    %v1789 = vadd.f32 %v1775, %v1788
    %v1790 = vpop.f32.mrf.mxu0
    %v1791 = vadd.f32 %v1777, %v1790
    %1792 = vdwg.mxu0
    %1793 = vmatpush.bf16.msra.mxu0 %v1455
    %1794 = vmatpush.bf16.msra.mxu0 %v1451
    %1795 = vmatpush.bf16.msra.mxu0 %v1447
    %1796 = vmatpush.bf16.msra.mxu0 %v1443
    %1797 = vmatpush.bf16.msra.mxu0 %v1439
    %1798 = vmatpush.bf16.msra.mxu0 %v1435
    %1799 = vmatpush.bf16.msra.mxu0 %v1431
    %1800 = vmatpush.bf16.msra.mxu0 %v1427
    %1801 = vmatmul.bf16.gmra.mxu0 %v899
    %v1802 = vpop.f32.mrf.mxu0
    %v1803 = vadd.f32 %v1035, %v1802
    %v1804 = vpop.f32.mrf.mxu0
    %v1805 = vadd.f32 %v1035, %v1804
    %1806 = vdwg.mxu0
    %1807 = vmatpush.bf16.msra.mxu0 %v1487
    %1808 = vmatpush.bf16.msra.mxu0 %v1483
    %1809 = vmatpush.bf16.msra.mxu0 %v1479
    %1810 = vmatpush.bf16.msra.mxu0 %v1475
    %1811 = vmatpush.bf16.msra.mxu0 %v1471
    %1812 = vmatpush.bf16.msra.mxu0 %v1467
    %1813 = vmatpush.bf16.msra.mxu0 %v1463
    %1814 = vmatpush.bf16.msra.mxu0 %v1459
    %1815 = vmatmul.bf16.gmra.mxu0 %v900
    %v1816 = vpop.f32.mrf.mxu0
    %v1817 = vadd.f32 %v1803, %v1816
    %v1818 = vpop.f32.mrf.mxu0
    %v1819 = vadd.f32 %v1805, %v1818
    %1820 = vdwg.mxu0
    %1821 = vmatpush.bf16.msra.mxu0 %v1519
    %1822 = vmatpush.bf16.msra.mxu0 %v1515
    %1823 = vmatpush.bf16.msra.mxu0 %v1511
    %1824 = vmatpush.bf16.msra.mxu0 %v1507
    %1825 = vmatpush.bf16.msra.mxu0 %v1503
    %1826 = vmatpush.bf16.msra.mxu0 %v1499
    %1827 = vmatpush.bf16.msra.mxu0 %v1495
    %1828 = vmatpush.bf16.msra.mxu0 %v1491
    %1829 = vmatmul.bf16.gmra.mxu0 %v901
    %v1830 = vpop.f32.mrf.mxu0
    %v1831 = vadd.f32 %v1817, %v1830
    %v1832 = vpop.f32.mrf.mxu0
    %v1833 = vadd.f32 %v1819, %v1832
    %1834 = vdwg.mxu0
    %1835 = vmatpush.bf16.msra.mxu0 %v1551
    %1836 = vmatpush.bf16.msra.mxu0 %v1547
    %1837 = vmatpush.bf16.msra.mxu0 %v1543
    %1838 = vmatpush.bf16.msra.mxu0 %v1539
    %1839 = vmatpush.bf16.msra.mxu0 %v1535
    %1840 = vmatpush.bf16.msra.mxu0 %v1531
    %1841 = vmatpush.bf16.msra.mxu0 %v1527
    %1842 = vmatpush.bf16.msra.mxu0 %v1523
    %1843 = vmatmul.bf16.gmra.mxu0 %v902
    %v1844 = vpop.f32.mrf.mxu0
    %v1845 = vadd.f32 %v1831, %v1844
    %v1846 = vpop.f32.mrf.mxu0
    %v1847 = vadd.f32 %v1833, %v1846
    %1848 = vdwg.mxu0
    %1849 = vmatpush.bf16.msra.mxu0 %v1456
    %1850 = vmatpush.bf16.msra.mxu0 %v1452
    %1851 = vmatpush.bf16.msra.mxu0 %v1448
    %1852 = vmatpush.bf16.msra.mxu0 %v1444
    %1853 = vmatpush.bf16.msra.mxu0 %v1440
    %1854 = vmatpush.bf16.msra.mxu0 %v1436
    %1855 = vmatpush.bf16.msra.mxu0 %v1432
    %1856 = vmatpush.bf16.msra.mxu0 %v1428
    %1857 = vmatmul.bf16.gmra.mxu0 %v899
    %v1858 = vpop.f32.mrf.mxu0
    %v1859 = vadd.f32 %v1036, %v1858
    %v1860 = vpop.f32.mrf.mxu0
    %v1861 = vadd.f32 %v1036, %v1860
    %1862 = vdwg.mxu0
    %1863 = vmatpush.bf16.msra.mxu0 %v1488
    %1864 = vmatpush.bf16.msra.mxu0 %v1484
    %1865 = vmatpush.bf16.msra.mxu0 %v1480
    %1866 = vmatpush.bf16.msra.mxu0 %v1476
    %1867 = vmatpush.bf16.msra.mxu0 %v1472
    %1868 = vmatpush.bf16.msra.mxu0 %v1468
    %1869 = vmatpush.bf16.msra.mxu0 %v1464
    %1870 = vmatpush.bf16.msra.mxu0 %v1460
    %1871 = vmatmul.bf16.gmra.mxu0 %v900
    %v1872 = vpop.f32.mrf.mxu0
    %v1873 = vadd.f32 %v1859, %v1872
    %v1874 = vpop.f32.mrf.mxu0
    %v1875 = vadd.f32 %v1861, %v1874
    %1876 = vdwg.mxu0
    %1877 = vmatpush.bf16.msra.mxu0 %v1520
    %1878 = vmatpush.bf16.msra.mxu0 %v1516
    %1879 = vmatpush.bf16.msra.mxu0 %v1512
    %1880 = vmatpush.bf16.msra.mxu0 %v1508
    %1881 = vmatpush.bf16.msra.mxu0 %v1504
    %1882 = vmatpush.bf16.msra.mxu0 %v1500
    %1883 = vmatpush.bf16.msra.mxu0 %v1496
    %1884 = vmatpush.bf16.msra.mxu0 %v1492
    %1885 = vmatmul.bf16.gmra.mxu0 %v901
    %v1886 = vpop.f32.mrf.mxu0
    %v1887 = vadd.f32 %v1873, %v1886
    %v1888 = vpop.f32.mrf.mxu0
    %v1889 = vadd.f32 %v1875, %v1888
    %1890 = vdwg.mxu0
    %1891 = vmatpush.bf16.msra.mxu0 %v1552
    %1892 = vmatpush.bf16.msra.mxu0 %v1548
    %1893 = vmatpush.bf16.msra.mxu0 %v1544
    %1894 = vmatpush.bf16.msra.mxu0 %v1540
    %1895 = vmatpush.bf16.msra.mxu0 %v1536
    %1896 = vmatpush.bf16.msra.mxu0 %v1532
    %1897 = vmatpush.bf16.msra.mxu0 %v1528
    %1898 = vmatpush.bf16.msra.mxu0 %v1524
    %1899 = vmatmul.bf16.gmra.mxu0 %v902
    %v1900 = vpop.f32.mrf.mxu0
    %v1901 = vadd.f32 %v1887, %v1900
    %v1902 = vpop.f32.mrf.mxu0
    %v1903 = vadd.f32 %v1889, %v1902
    %1904 = vdwg.mxu0
    %v1905 = vmax.f32 %v1733, 0.0
    %v1906 = vmax.f32 %v1789, 0.0
    %v1907 = vmax.f32 %v1845, 0.0
    %v1908 = vmax.f32 %v1901, 0.0
    %v1909 = vmax.f32 %v1735, 0.0
    %v1910 = vmax.f32 %v1791, 0.0
    %v1911 = vmax.f32 %v1847, 0.0
    %v1912 = vmax.f32 %v1903, 0.0
    %v1913 = vpack.c.bf16 %v1909, %v1905
    %v1914 = vpack.c.bf16 %v1910, %v1906
    %v1915 = vpack.c.bf16 %v1911, %v1907
    %v1916 = vpack.c.bf16 %v1912, %v1908
    %v1917 = vld [vmem:[#allocation11] sm:$0xf]
    %v1918 = vld [vmem:[#allocation11 + $0x4] sm:$0xf]
    %v1919 = vld [vmem:[#allocation11 + $0x8] sm:$0xf]
    %v1920 = vld [vmem:[#allocation11 + $0xc] sm:$0xf]
    %v1921 = vld [vmem:[#allocation11 + $0x10] sm:$0xf]
    %v1922 = vld [vmem:[#allocation11 + $0x14] sm:$0xf]
    %v1923 = vld [vmem:[#allocation11 + $0x18] sm:$0xf]
    %v1924 = vld [vmem:[#allocation11 + $0x1c] sm:$0xf]
    %v1925 = vld [vmem:[#allocation11 + $0x20] sm:$0xf]
    %v1926 = vld [vmem:[#allocation11 + $0x24] sm:$0xf]
    %v1927 = vld [vmem:[#allocation11 + $0x28] sm:$0xf]
    %v1928 = vld [vmem:[#allocation11 + $0x2c] sm:$0xf]
    %v1929 = vld [vmem:[#allocation11 + $0x30] sm:$0xf]
    %v1930 = vld [vmem:[#allocation11 + $0x34] sm:$0xf]
    %v1931 = vld [vmem:[#allocation11 + $0x38] sm:$0xf]
    %v1932 = vld [vmem:[#allocation11 + $0x3c] sm:$0xf]
    %v1933 = vld [vmem:[#allocation11 + $0x40] sm:$0xf]
    %v1934 = vld [vmem:[#allocation11 + $0x44] sm:$0xf]
    %v1935 = vld [vmem:[#allocation11 + $0x48] sm:$0xf]
    %v1936 = vld [vmem:[#allocation11 + $0x4c] sm:$0xf]
    %v1937 = vld [vmem:[#allocation11 + $0x50] sm:$0xf]
    %v1938 = vld [vmem:[#allocation11 + $0x54] sm:$0xf]
    %v1939 = vld [vmem:[#allocation11 + $0x58] sm:$0xf]
    %v1940 = vld [vmem:[#allocation11 + $0x5c] sm:$0xf]
    %v1941 = vld [vmem:[#allocation11 + $0x60] sm:$0xf]
    %v1942 = vld [vmem:[#allocation11 + $0x64] sm:$0xf]
    %v1943 = vld [vmem:[#allocation11 + $0x68] sm:$0xf]
    %v1944 = vld [vmem:[#allocation11 + $0x6c] sm:$0xf]
    %v1945 = vld [vmem:[#allocation11 + $0x70] sm:$0xf]
    %v1946 = vld [vmem:[#allocation11 + $0x74] sm:$0xf]
    %v1947 = vld [vmem:[#allocation11 + $0x78] sm:$0xf]
    %v1948 = vld [vmem:[#allocation11 + $0x7c] sm:$0xf]
    %v1949 = vld [vmem:[#allocation11 + $0x80] sm:$0xf]
    %v1950 = vld [vmem:[#allocation11 + $0x84] sm:$0xf]
    %v1951 = vld [vmem:[#allocation11 + $0x88] sm:$0xf]
    %v1952 = vld [vmem:[#allocation11 + $0x8c] sm:$0xf]
    %v1953 = vld [vmem:[#allocation11 + $0x90] sm:$0xf]
    %v1954 = vld [vmem:[#allocation11 + $0x94] sm:$0xf]
    %v1955 = vld [vmem:[#allocation11 + $0x98] sm:$0xf]
    %v1956 = vld [vmem:[#allocation11 + $0x9c] sm:$0xf]
    %v1957 = vld [vmem:[#allocation11 + $0xa0] sm:$0xf]
    %v1958 = vld [vmem:[#allocation11 + $0xa4] sm:$0xf]
    %v1959 = vld [vmem:[#allocation11 + $0xa8] sm:$0xf]
    %v1960 = vld [vmem:[#allocation11 + $0xac] sm:$0xf]
    %v1961 = vld [vmem:[#allocation11 + $0xb0] sm:$0xf]
    %v1962 = vld [vmem:[#allocation11 + $0xb4] sm:$0xf]
    %v1963 = vld [vmem:[#allocation11 + $0xb8] sm:$0xf]
    %v1964 = vld [vmem:[#allocation11 + $0xbc] sm:$0xf]
    %v1965 = vld [vmem:[#allocation11 + $0xc0] sm:$0xf]
    %v1966 = vld [vmem:[#allocation11 + $0xc4] sm:$0xf]
    %v1967 = vld [vmem:[#allocation11 + $0xc8] sm:$0xf]
    %v1968 = vld [vmem:[#allocation11 + $0xcc] sm:$0xf]
    %v1969 = vld [vmem:[#allocation11 + $0xd0] sm:$0xf]
    %v1970 = vld [vmem:[#allocation11 + $0xd4] sm:$0xf]
    %v1971 = vld [vmem:[#allocation11 + $0xd8] sm:$0xf]
    %v1972 = vld [vmem:[#allocation11 + $0xdc] sm:$0xf]
    %v1973 = vld [vmem:[#allocation11 + $0xe0] sm:$0xf]
    %v1974 = vld [vmem:[#allocation11 + $0xe4] sm:$0xf]
    %v1975 = vld [vmem:[#allocation11 + $0xe8] sm:$0xf]
    %v1976 = vld [vmem:[#allocation11 + $0xec] sm:$0xf]
    %v1977 = vld [vmem:[#allocation11 + $0xf0] sm:$0xf]
    %v1978 = vld [vmem:[#allocation11 + $0xf4] sm:$0xf]
    %v1979 = vld [vmem:[#allocation11 + $0xf8] sm:$0xf]
    %v1980 = vld [vmem:[#allocation11 + $0xfc] sm:$0xf]
    %v1981 = vld [vmem:[%s6] sm:$0x1]
    %v1983 = vperm.slane %v1981, 0
    %v2049 = vunpack.c.l.b16 %v1917
    %v2050 = vunpack.c.l.b16 %v1918
    %v2051 = vunpack.c.l.b16 %v1919
    %v2052 = vunpack.c.l.b16 %v1920
    %v2053 = vunpack.c.l.b16 %v1921
    %v2054 = vunpack.c.l.b16 %v1922
    %v2055 = vunpack.c.l.b16 %v1923
    %v2056 = vunpack.c.l.b16 %v1924
    %v2057 = vunpack.c.l.b16 %v1925
    %v2058 = vunpack.c.l.b16 %v1926
    %v2059 = vunpack.c.l.b16 %v1927
    %v2060 = vunpack.c.l.b16 %v1928
    %v2061 = vunpack.c.l.b16 %v1929
    %v2062 = vunpack.c.l.b16 %v1930
    %v2063 = vunpack.c.l.b16 %v1931
    %v2064 = vunpack.c.l.b16 %v1932
    %v2065 = vunpack.c.l.b16 %v1933
    %v2066 = vunpack.c.l.b16 %v1934
    %v2067 = vunpack.c.l.b16 %v1935
    %v2068 = vunpack.c.l.b16 %v1936
    %v2069 = vunpack.c.l.b16 %v1937
    %v2070 = vunpack.c.l.b16 %v1938
    %v2071 = vunpack.c.l.b16 %v1939
    %v2072 = vunpack.c.l.b16 %v1940
    %v2073 = vunpack.c.l.b16 %v1941
    %v2074 = vunpack.c.l.b16 %v1942
    %v2075 = vunpack.c.l.b16 %v1943
    %v2076 = vunpack.c.l.b16 %v1944
    %v2077 = vunpack.c.l.b16 %v1945
    %v2078 = vunpack.c.l.b16 %v1946
    %v2079 = vunpack.c.l.b16 %v1947
    %v2080 = vunpack.c.l.b16 %v1948
    %v2081 = vunpack.c.l.b16 %v1949
    %v2082 = vunpack.c.l.b16 %v1950
    %v2083 = vunpack.c.l.b16 %v1951
    %v2084 = vunpack.c.l.b16 %v1952
    %v2085 = vunpack.c.l.b16 %v1953
    %v2086 = vunpack.c.l.b16 %v1954
    %v2087 = vunpack.c.l.b16 %v1955
    %v2088 = vunpack.c.l.b16 %v1956
    %v2089 = vunpack.c.l.b16 %v1957
    %v2090 = vunpack.c.l.b16 %v1958
    %v2091 = vunpack.c.l.b16 %v1959
    %v2092 = vunpack.c.l.b16 %v1960
    %v2093 = vunpack.c.l.b16 %v1961
    %v2094 = vunpack.c.l.b16 %v1962
    %v2095 = vunpack.c.l.b16 %v1963
    %v2096 = vunpack.c.l.b16 %v1964
    %v2097 = vunpack.c.l.b16 %v1965
    %v2098 = vunpack.c.l.b16 %v1966
    %v2099 = vunpack.c.l.b16 %v1967
    %v2100 = vunpack.c.l.b16 %v1968
    %v2101 = vunpack.c.l.b16 %v1969
    %v2102 = vunpack.c.l.b16 %v1970
    %v2103 = vunpack.c.l.b16 %v1971
    %v2104 = vunpack.c.l.b16 %v1972
    %v2105 = vunpack.c.l.b16 %v1973
    %v2106 = vunpack.c.l.b16 %v1974
    %v2107 = vunpack.c.l.b16 %v1975
    %v2108 = vunpack.c.l.b16 %v1976
    %v2109 = vunpack.c.l.b16 %v1977
    %v2110 = vunpack.c.l.b16 %v1978
    %v2111 = vunpack.c.l.b16 %v1979
    %v2112 = vunpack.c.l.b16 %v1980
    %v2113 = vpack.c.b16 %v2050, %v2049
    %v2114 = vpack.c.b16 %v2052, %v2051
    %v2115 = vpack.c.b16 %v2054, %v2053
    %v2116 = vpack.c.b16 %v2056, %v2055
    %v2117 = vpack.c.b16 %v2058, %v2057
    %v2118 = vpack.c.b16 %v2060, %v2059
    %v2119 = vpack.c.b16 %v2062, %v2061
    %v2120 = vpack.c.b16 %v2064, %v2063
    %v2121 = vpack.c.b16 %v2066, %v2065
    %v2122 = vpack.c.b16 %v2068, %v2067
    %v2123 = vpack.c.b16 %v2070, %v2069
    %v2124 = vpack.c.b16 %v2072, %v2071
    %v2125 = vpack.c.b16 %v2074, %v2073
    %v2126 = vpack.c.b16 %v2076, %v2075
    %v2127 = vpack.c.b16 %v2078, %v2077
    %v2128 = vpack.c.b16 %v2080, %v2079
    %v2129 = vpack.c.b16 %v2082, %v2081
    %v2130 = vpack.c.b16 %v2084, %v2083
    %v2131 = vpack.c.b16 %v2086, %v2085
    %v2132 = vpack.c.b16 %v2088, %v2087
    %v2133 = vpack.c.b16 %v2090, %v2089
    %v2134 = vpack.c.b16 %v2092, %v2091
    %v2135 = vpack.c.b16 %v2094, %v2093
    %v2136 = vpack.c.b16 %v2096, %v2095
    %v2137 = vpack.c.b16 %v2098, %v2097
    %v2138 = vpack.c.b16 %v2100, %v2099
    %v2139 = vpack.c.b16 %v2102, %v2101
    %v2140 = vpack.c.b16 %v2104, %v2103
    %v2141 = vpack.c.b16 %v2106, %v2105
    %v2142 = vpack.c.b16 %v2108, %v2107
    %v2143 = vpack.c.b16 %v2110, %v2109
    %v2144 = vpack.c.b16 %v2112, %v2111
    %2177 = vmatpush.bf16.msra.mxu0 %v2120
    %2178 = vmatpush.bf16.msra.mxu0 %v2119
    %2179 = vmatpush.bf16.msra.mxu0 %v2118
    %2180 = vmatpush.bf16.msra.mxu0 %v2117
    %2181 = vmatpush.bf16.msra.mxu0 %v2116
    %2182 = vmatpush.bf16.msra.mxu0 %v2115
    %2183 = vmatpush.bf16.msra.mxu0 %v2114
    %2184 = vmatpush.bf16.msra.mxu0 %v2113
    %2185 = vmatmul.bf16.gmra.mxu0 %v1913
    %v2186 = vpop.f32.mrf.mxu0
    %v2187 = vadd.f32 %v1983, %v2186
    %v2188 = vpop.f32.mrf.mxu0
    %v2189 = vadd.f32 %v1983, %v2188
    %2190 = vdwg.mxu0
    %2191 = vmatpush.bf16.msra.mxu0 %v2128
    %2192 = vmatpush.bf16.msra.mxu0 %v2127
    %2193 = vmatpush.bf16.msra.mxu0 %v2126
    %2194 = vmatpush.bf16.msra.mxu0 %v2125
    %2195 = vmatpush.bf16.msra.mxu0 %v2124
    %2196 = vmatpush.bf16.msra.mxu0 %v2123
    %2197 = vmatpush.bf16.msra.mxu0 %v2122
    %2198 = vmatpush.bf16.msra.mxu0 %v2121
    %2199 = vmatmul.bf16.gmra.mxu0 %v1914
    %v2200 = vpop.f32.mrf.mxu0
    %v2201 = vadd.f32 %v2187, %v2200
    %v2202 = vpop.f32.mrf.mxu0
    %v2203 = vadd.f32 %v2189, %v2202
    %2204 = vdwg.mxu0
    %2205 = vmatpush.bf16.msra.mxu0 %v2136
    %2206 = vmatpush.bf16.msra.mxu0 %v2135
    %2207 = vmatpush.bf16.msra.mxu0 %v2134
    %2208 = vmatpush.bf16.msra.mxu0 %v2133
    %2209 = vmatpush.bf16.msra.mxu0 %v2132
    %2210 = vmatpush.bf16.msra.mxu0 %v2131
    %2211 = vmatpush.bf16.msra.mxu0 %v2130
    %2212 = vmatpush.bf16.msra.mxu0 %v2129
    %2213 = vmatmul.bf16.gmra.mxu0 %v1915
    %v2214 = vpop.f32.mrf.mxu0
    %v2215 = vadd.f32 %v2201, %v2214
    %v2216 = vpop.f32.mrf.mxu0
    %v2217 = vadd.f32 %v2203, %v2216
    %2218 = vdwg.mxu0
    %2219 = vmatpush.bf16.msra.mxu0 %v2144
    %2220 = vmatpush.bf16.msra.mxu0 %v2143
    %2221 = vmatpush.bf16.msra.mxu0 %v2142
    %2222 = vmatpush.bf16.msra.mxu0 %v2141
    %2223 = vmatpush.bf16.msra.mxu0 %v2140
    %2224 = vmatpush.bf16.msra.mxu0 %v2139
    %2225 = vmatpush.bf16.msra.mxu0 %v2138
    %2226 = vmatpush.bf16.msra.mxu0 %v2137
    %2227 = vmatmul.bf16.gmra.mxu0 %v1916
    %v2228 = vpop.f32.mrf.mxu0
    %v2229 = vadd.f32 %v2215, %v2228
    %v2230 = vpop.f32.mrf.mxu0
    %v2231 = vadd.f32 %v2217, %v2230
    %2232 = vdwg.mxu0
    %v2233 = vsub.f32 0.0, %v2229
    %v2234 = vsub.f32 0.0, %v2231
    %v2235 = vmul.f32 %v2233, 1.442695
    %v2236 = vpow.pop %v2235
    %v2237 = vmul.f32 %v2234, 1.442695
    %v2238 = vpow.pop %v2237
    %v2239 = vadd.f32 %v2236, 1.0
    %v2240 = vadd.f32 %v2238, 1.0
    %v2241 = vrcp.pop %v2239
    %v2242 = vrcp.pop %v2240
    %2243 = vst [vmem:[#allocation13] sm:$0xff] %v2241
    %2244 = vst [vmem:[#allocation13 + $0x8] sm:$0xff] %v2242
    // Predicated region
    $region54: #{tpu_custom_call.1} parent=1 // pred_check
      _
    $region55: #{tpu_custom_call.1} parent=1 // pred_check_branch
      %2246 = sbr.rel (0) target = $region57
    $region56: #{tpu_custom_call.1} parent=1 // pred_region
      %2248 = vsyncadd [#allocation4], 0
      %s2249 = sshll.u32 [#allocation13], 4
      %s2250 = int_to_ptr.vmem [resolvable:$true] %s2249
      %s2251 = sshll.u32 %s7, 4
      %s2252 = int_to_ptr.hbm [resolvable:$true] %s2251
      %2257 = dma.vmem_to_hbm [thread:$0]  %s2250, 256, %s2252, [#allocation4], 128, 128, 8
    $region57: #{tpu_custom_call.1} parent=1 // pred_fallthru
      _
    // Predicated region
    $region58: #{tpu_custom_call.1} parent=1 // pred_check
      _
    $region59: #{tpu_custom_call.1} parent=1 // pred_check_branch
      %2259 = sbr.rel (0) target = $region61
    $region60: #{tpu_custom_call.1} parent=1 // pred_region
      %2261 = dma.done [#allocation4], 256
    $region61: #{tpu_custom_call.1} parent=1 // pred_fallthru
      _
    %2262 = vsyncpa [#allocation3], 1
    %2263 = vsyncpa [#allocation6], 1
    %2264 = vsyncpa [#allocation9], 1
    %2265 = vsyncpa [#allocation12], 1
    %2266 = vsyncpa [#allocation4], 1

</llo_original>
